<compile_context>
chip_gen: v7x
topology: tpu7x:2x2x1
jax: 0.10.0
libtpu: 0.0.40
codegen_flags: <defaults>
</compile_context>

<pallas_src>
import functools

import jax
import jax.numpy as jnp
from jax.experimental import pallas as pl
from jax.experimental.pallas import tpu as pltpu


# ----------------------------------------------------------------------------
# small padding helpers (wrapper side)
# ----------------------------------------------------------------------------
def _round_up(x, m):
    return (x + m - 1) // m * m


def _pad_axis(x, axis, target):
    pad = target - x.shape[axis]
    if pad <= 0:
        return x
    widths = [(0, 0)] * x.ndim
    widths[axis] = (0, pad)
    return jnp.pad(x, widths)


def _pad_gate_cols(w_t, H, Hp):
    """w_t: (in_dim, 4H) -> (in_dim, 4Hp); each gate block padded separately
    so gate k lives in lanes [k*Hp, (k+1)*Hp) (128-aligned slices)."""
    in_dim = w_t.shape[0]
    w4 = w_t.reshape(in_dim, 4, H)
    w4 = _pad_axis(w4, 2, Hp)
    return w4.reshape(in_dim, 4 * Hp)


# ----------------------------------------------------------------------------
# Kernel 1: single-layer LSTM, time-major, gridded over (B-tiles, T-tiles)
# ----------------------------------------------------------------------------
def lstm_kernel(x_ref, wih_ref, whh_ref, b_ref, h0_ref, c0_ref, st_ref,
                gx_sc, h_sc, c_sc, *, hidden_pad):
    Hp = hidden_pad
    Tt, Bt, E = x_ref.shape

    # (Re)initialize the recurrence carry at the first T-block of each B-block.
    @pl.when(pl.program_id(1) == 0)
    def _():
        h_sc[...] = h0_ref[...]
        c_sc[...] = c0_ref[...]

    # Hoisted input projection for the whole T-block: one tall matmul
    # (Tt*Bt, E) @ (E, 4Hp) + bias, instead of Tt tiny (Bt, E) matmuls.
    x2d = x_ref[...].reshape(Tt * Bt, E)
    gx = jnp.dot(x2d, wih_ref[...], preferred_element_type=jnp.float32) + b_ref[...]
    gx_sc[...] = gx.reshape(Tt, Bt, 4 * Hp)

    # Hoist weight load out of the loop (JAX does not CSE these per-iter).
    wh = whh_ref[...]

    def step(t, carry):
        h, c = carry
        gates = gx_sc[t] + jnp.dot(h, wh, preferred_element_type=jnp.float32)
        # Gate slices are 128-lane aligned because Hp % 128 == 0.
        i_g = jax.nn.sigmoid(gates[:, 0 * Hp:1 * Hp])
        f_g = jax.nn.sigmoid(gates[:, 1 * Hp:2 * Hp])
        g_g = jnp.tanh(gates[:, 2 * Hp:3 * Hp])
        o_g = jax.nn.sigmoid(gates[:, 3 * Hp:4 * Hp])
        c_new = f_g * c + i_g * g_g
        h_new = o_g * jnp.tanh(c_new)
        st_ref[t] = h_new
        return (h_new, c_new)

    h_f, c_f = jax.lax.fori_loop(0, Tt, step, (h_sc[...], c_sc[...]),
                                 unroll=True)
    h_sc[...] = h_f
    c_sc[...] = c_f


def lstm_layer(x_tm, w_ih_t, w_hh_t, bias_row, h0, c0, *, block_t, block_b):
    """x_tm: (T, B, E) f32.  w_ih_t: (E, 4Hp), w_hh_t: (Hp, 4Hp),
    bias_row: (1, 4Hp), h0/c0: (B, Hp).  Returns st (T, B, Hp)."""
    T, B, E = x_tm.shape
    Hp = h0.shape[-1]
    assert T % block_t == 0 and B % block_b == 0
    grid = (B // block_b, T // block_t)
    kern = functools.partial(lstm_kernel, hidden_pad=Hp)
    return pl.pallas_call(
        kern,
        out_shape=jax.ShapeDtypeStruct((T, B, Hp), jnp.float32),
        grid_spec=pltpu.PrefetchScalarGridSpec(
            num_scalar_prefetch=0,
            grid=grid,
            in_specs=[
                pl.BlockSpec((block_t, block_b, E), lambda b, t: (t, b, 0)),
                pl.BlockSpec((E, 4 * Hp), lambda b, t: (0, 0)),
                pl.BlockSpec((Hp, 4 * Hp), lambda b, t: (0, 0)),
                pl.BlockSpec((1, 4 * Hp), lambda b, t: (0, 0)),
                pl.BlockSpec((block_b, Hp), lambda b, t: (b, 0)),
                pl.BlockSpec((block_b, Hp), lambda b, t: (b, 0)),
            ],
            out_specs=pl.BlockSpec((block_t, block_b, Hp),
                                   lambda b, t: (t, b, 0)),
            scratch_shapes=[
                pltpu.VMEM((block_t, block_b, 4 * Hp), jnp.float32),  # gx
                pltpu.VMEM((block_b, Hp), jnp.float32),               # h carry
                pltpu.VMEM((block_b, Hp), jnp.float32),               # c carry
            ],
        ),
        compiler_params=pltpu.CompilerParams(
            dimension_semantics=("parallel", "arbitrary")),
    )(x_tm, w_ih_t, w_hh_t, bias_row, h0, c0)


# ----------------------------------------------------------------------------
# Kernel 2: Luong "general" attention + target masking + output projection
#           gridded over B ("parallel"), lane-dense Hp/Vp
# ----------------------------------------------------------------------------
def attn_out_kernel(st_ref, hx_ref, msrc_ref, mtgt_ref, wa_ref,
                    wst_ref, wct_ref, logits_ref, pred_ref, *, vocab_size):
    Bt, T, Hp = st_ref.shape
    Vp = wst_ref.shape[1]
    neg = jnp.float32(jnp.finfo(jnp.float32).min)

    st = st_ref[...]        # (Bt, T, Hp)
    hx = hx_ref[...]        # (Bt, S, Hp)
    msrc = msrc_ref[...]    # (Bt, S) float {0,1}
    mtgt = mtgt_ref[...]    # (Bt, T) float {0,1}

    # scores = (st @ W_a) @ hx^T ; first matmul collapsed to one tall 2D matmul
    st2 = jnp.dot(st.reshape(Bt * T, Hp), wa_ref[...],
                  preferred_element_type=jnp.float32).reshape(Bt, T, Hp)
    scores = jnp.einsum('btk,bsk->bts', st2, hx,
                        preferred_element_type=jnp.float32)
    scores = jnp.where(msrc[:, None, :] > 0, scores, neg)

    # masked softmax over source positions; divide goes to the EUP slot
    m = jnp.max(scores, axis=-1, keepdims=True)
    e = jnp.exp(scores - m)
    alpha = e * pl.reciprocal(jnp.sum(e, axis=-1, keepdims=True), approx=True)

    ct = jnp.einsum('bts,bsh->bth', alpha, hx,
                    preferred_element_type=jnp.float32)   # (Bt, T, Hp)

    # concat([st, ct], -1) * mask_tgt, then the bias-free linear, realized as
    # two tall 2D half-matmuls (M = Bt*T rows for the MXU).
    st_m = (st * mtgt[:, :, None]).reshape(Bt * T, Hp)
    ct_m = (ct * mtgt[:, :, None]).reshape(Bt * T, Hp)
    logits2d = (
        jnp.dot(st_m, wst_ref[...], preferred_element_type=jnp.float32)
        + jnp.dot(ct_m, wct_ref[...], preferred_element_type=jnp.float32)
    )                                                     # (Bt*T, Vp)
    logits3 = logits2d.reshape(Bt, T, Vp)
    logits_ref[...] = logits3

    # argmax over the REAL vocab only (padded columns excluded); first index
    # wins on ties, matching torch / jnp.
    idx = jax.lax.broadcasted_iota(jnp.int32, (Bt, T, Vp), 2)
    masked = jnp.where(idx < vocab_size, logits3, neg)
    maxv = jnp.max(masked, axis=-1, keepdims=True)
    cand = jnp.where(masked >= maxv, idx, jnp.int32(Vp))
    pred_ref[...] = jnp.min(cand, axis=-1).astype(jnp.int32)


def attn_out(st, hx_src, mask_src, mask_tgt, w_attn, w_st, w_ct,
             vocab_size, *, block_b):
    B, T, Hp = st.shape
    S = hx_src.shape[1]
    Vp = w_st.shape[1]
    assert B % block_b == 0
    kern = functools.partial(attn_out_kernel, vocab_size=vocab_size)
    return pl.pallas_call(
        kern,
        out_shape=(jax.ShapeDtypeStruct((B, T, Vp), jnp.float32),
                   jax.ShapeDtypeStruct((B, T), jnp.int32)),
        grid_spec=pltpu.PrefetchScalarGridSpec(
            num_scalar_prefetch=0,
            grid=(B // block_b,),
            in_specs=[
                pl.BlockSpec((block_b, T, Hp), lambda b: (b, 0, 0)),
                pl.BlockSpec((block_b, S, Hp), lambda b: (b, 0, 0)),
                pl.BlockSpec((block_b, S), lambda b: (b, 0)),
                pl.BlockSpec((block_b, T), lambda b: (b, 0)),
                pl.BlockSpec((Hp, Hp), lambda b: (0, 0)),
                pl.BlockSpec((Hp, Vp), lambda b: (0, 0)),
                pl.BlockSpec((Hp, Vp), lambda b: (0, 0)),
            ],
            out_specs=(pl.BlockSpec((block_b, T, Vp), lambda b: (b, 0, 0)),
                       pl.BlockSpec((block_b, T), lambda b: (b, 0))),
        ),
        compiler_params=pltpu.CompilerParams(
            dimension_semantics=("parallel",)),
    )(st, hx_src, mask_src, mask_tgt, w_attn, w_st, w_ct)
    # TODO(synk): for realistic vocab sizes, add a grid axis over V-tiles with
    # a running (max, idx) accumulator in scratch instead of the whole Vp row.


# ----------------------------------------------------------------------------
# Parameter construction (deterministic, in-script; mirrors __init__ shapes)
# ----------------------------------------------------------------------------
def init_params(key, vocab_size, emb_dim, dec_hdim, num_layers):
    keys = jax.random.split(key, 7 + 4 * num_layers)
    embed = jax.random.normal(keys[0], (vocab_size, emb_dim), jnp.float32)
    # nn.Linear(dec_hdim*2, vocab_size, bias=False), kaiming_normal_(a=1, fan_in)
    w_linear = jax.random.normal(keys[1], (vocab_size, 2 * dec_hdim),
                                 jnp.float32) / jnp.sqrt(2.0 * dec_hdim)
    # Attention "general": W_a (dec_hdim, dec_hdim)
    w_attn = jax.random.normal(keys[2], (dec_hdim, dec_hdim),
                               jnp.float32) / jnp.sqrt(1.0 * dec_hdim)
    w_ih, w_hh, b_ih, b_hh = [], [], [], []
    for l in range(num_layers):
        in_dim = emb_dim if l == 0 else dec_hdim
        k0, k1, k2, k3 = keys[3 + 4 * l: 7 + 4 * l]
        w_ih.append(jax.random.normal(k0, (4 * dec_hdim, in_dim),
                                      jnp.float32) / jnp.sqrt(1.0 * in_dim))
        w_hh.append(jax.random.normal(k1, (4 * dec_hdim, dec_hdim),
                                      jnp.float32) / jnp.sqrt(1.0 * dec_hdim))
        b_ih.append(jax.random.normal(k2, (4 * dec_hdim,), jnp.float32))
        b_hh.append(jax.random.normal(k3, (4 * dec_hdim,), jnp.float32))
    return dict(embed=embed, w_linear=w_linear, w_attn=w_attn,
                w_ih=w_ih, w_hh=w_hh, b_ih=b_ih, b_hh=b_hh,
                num_layers=num_layers, dec_hdim=dec_hdim)


# ----------------------------------------------------------------------------
# Forward (glue in JAX; heavy compute inside the two Pallas kernels)
# ----------------------------------------------------------------------------
def decoder_lstm_forward(params, hx_src, tgt_seqs, mask_src, mask_tgt,
                         decoder_iniHidden, *, block_t=4, block_b=None):
    num_layers = params['num_layers']
    H = params['dec_hdim']
    V = params['w_linear'].shape[0]
    E = params['embed'].shape[1]
    B, T = tgt_seqs.shape
    Hp = _round_up(H, 128)
    Vp = _round_up(V, 128)
    if block_b is None:
        block_b = B

    # --- initial hidden state reshuffle (reproduces original, incl. c0 quirk) ---
    h0, c0 = decoder_iniHidden  # each (num_layers*2, B, H//2)
    h0 = h0.reshape(num_layers, 2, B, -1)
    h0 = jnp.concatenate([h0[:, 0], h0[:, 1]], axis=-1)          # (L, B, H)
    c0 = h0.reshape(num_layers, 2, B, -1)
    c0 = jnp.concatenate([c0[:, 0], c0[:, 1]], axis=-1)          # (L, B, H)
    h0 = _pad_axis(h0.astype(jnp.float32), 2, Hp)                # (L, B, Hp)
    c0 = _pad_axis(c0.astype(jnp.float32), 2, Hp)

    # --- shift targets: prepend BOS(=3), drop last token, embed ---
    bos = jnp.full((B, 1), 3, dtype=tgt_seqs.dtype)
    tgt_seqs_input = jnp.concatenate([bos, tgt_seqs[:, :-1]], axis=1)
    x = params['embed'][tgt_seqs_input].astype(jnp.float32)      # (B, T, E)

    tgt_lens = mask_tgt.sum(1)
    # TODO(synk): pack_padded_sequence / length-sorting omitted; it is a
    # semantic no-op here because padded positions are zeroed by mask_tgt
    # before the bias-free output projection.

    # --- LSTM (time-major, one gridded Pallas call per layer) ---
    layer_in = jnp.transpose(x, (1, 0, 2))                       # (T, B, E)
    for l in range(num_layers):
        in_dim_pad = layer_in.shape[-1]          # E for l==0, Hp afterwards
        w_ih_t = _pad_gate_cols(params['w_ih'][l].T, H, Hp)      # (in, 4Hp)
        w_ih_t = _pad_axis(w_ih_t, 0, in_dim_pad)                # zero rows
        w_hh_t = _pad_axis(_pad_gate_cols(params['w_hh'][l].T, H, Hp), 0, Hp)
        b = (params['b_ih'][l] + params['b_hh'][l]).reshape(4, H)
        b = _pad_axis(b, 1, Hp).reshape(1, 4 * Hp)
        layer_in = lstm_layer(layer_in, w_ih_t, w_hh_t, b, h0[l], c0[l],
                              block_t=block_t, block_b=block_b)
    # TODO(synk): multi-layer configs still round-trip st through HBM between
    # layers; a fused multi-layer kernel would keep st in VMEM scratch.
    st = jnp.transpose(layer_in, (1, 0, 2))                      # (B, T, Hp)

    # --- attention + mask + output projection + argmax ---
    w_attn = _pad_axis(_pad_axis(params['w_attn'], 0, Hp), 1, Hp)
    w_out_t = params['w_linear'].T                               # (2H, V)
    w_st = _pad_axis(_pad_axis(w_out_t[:H], 0, Hp), 1, Vp)       # (Hp, Vp)
    w_ct = _pad_axis(_pad_axis(w_out_t[H:], 0, Hp), 1, Vp)       # (Hp, Vp)
    hx_p = _pad_axis(hx_src.astype(jnp.float32), 2, Hp)          # (B, S, Hp)

    logits_p, pred = attn_out(
        st, hx_p,
        mask_src.astype(jnp.float32),
        mask_tgt.astype(jnp.float32),
        w_attn, w_st, w_ct, V, block_b=block_b)
    logits = logits_p[:, :, :V]
    return logits, tgt_seqs, tgt_lens, pred


# ----------------------------------------------------------------------------
if __name__ == "__main__":
    vocab_size, emb_dim, dec_hdim, num_layers = 64, 16, 32, 1
    B, T, S = 4, 8, 16

    key = jax.random.PRNGKey(0)
    k_param, k_hx, k_tgt, k_h0 = jax.random.split(key, 4)

    params = init_params(k_param, vocab_size, emb_dim, dec_hdim, num_layers)

    hx_src = jax.random.normal(k_hx, (B, S, dec_hdim), jnp.float32)
    tgt_seqs = jax.random.randint(k_tgt, (B, T), 0, vocab_size, jnp.int32)

    src_lens = jnp.array([16, 12, 10, 16])
    tgt_lens_true = jnp.array([8, 6, 5, 8])  # max == T (required by original)
    mask_src = (jnp.arange(S)[None, :] < src_lens[:, None]).astype(jnp.float32)
    mask_tgt = (jnp.arange(T)[None, :] < tgt_lens_true[:, None]).astype(jnp.float32)

    h0c0 = jax.random.normal(k_h0, (2, 2 * num_layers, B, dec_hdim // 2),
                             jnp.float32)
    decoder_iniHidden = (h0c0[0], h0c0[1])

    logits, tgt_out, tgt_lens, pred = decoder_lstm_forward(
        params, hx_src, tgt_seqs, mask_src, mask_tgt, decoder_iniHidden,
        block_t=4, block_b=B)

    jax.block_until_ready((logits, pred))
    assert logits.shape == (B, T, vocab_size)
    assert pred.shape == (B, T)
    print("KERNEL_OK")
</pallas_src>

<mosaic_0001>
module attributes {stable_mosaic.version = 11 : i64} {
  func.func @lstm_kernel(%arg0: i32, %arg1: i32, %arg2: memref<4x4x16xf32, #tpu.memory_space<vmem>>, %arg3: memref<16x512xf32, #tpu.memory_space<vmem>>, %arg4: memref<128x512xf32, #tpu.memory_space<vmem>>, %arg5: memref<1x512xf32, #tpu.memory_space<vmem>>, %arg6: memref<4x128xf32, #tpu.memory_space<vmem>>, %arg7: memref<4x128xf32, #tpu.memory_space<vmem>>, %arg8: memref<4x4x128xf32, #tpu.memory_space<vmem>>, %arg9: memref<4x4x512xf32, #tpu.memory_space<vmem>>, %arg10: memref<4x128xf32, #tpu.memory_space<vmem>>, %arg11: memref<4x128xf32, #tpu.memory_space<vmem>>) attributes {dimension_semantics = [#tpu.dimension_semantics<parallel>, #tpu.dimension_semantics<arbitrary>], iteration_bounds = array<i64: 1, 2>, scalar_prefetch = 0 : i64, scratch_operands = 3 : i64, tpu.core_type = #tpu.core_type<tc>, window_params = [{transform_indices = @transform_0, window_bounds = array<i64: 4, 4, 16>}, {pipeline_mode = #tpu.pipeline_mode<synchronous>, transform_indices = @transform_1, window_bounds = array<i64: 16, 512>}, {pipeline_mode = #tpu.pipeline_mode<synchronous>, transform_indices = @transform_2, window_bounds = array<i64: 128, 512>}, {pipeline_mode = #tpu.pipeline_mode<synchronous>, transform_indices = @transform_3, window_bounds = array<i64: 1, 512>}, {transform_indices = @transform_4, window_bounds = array<i64: 4, 128>}, {transform_indices = @transform_5, window_bounds = array<i64: 4, 128>}, {transform_indices = @transform_6, window_bounds = array<i64: 4, 4, 128>}]} {
    %c0_i32 = arith.constant 0 : i32
    %0 = arith.cmpi eq, %arg1, %c0_i32 : i32
    %1 = arith.extui %0 : i1 to i32
    %c0_i32_0 = arith.constant 0 : i32
    %2 = arith.cmpi ne, %1, %c0_i32_0 : i32
    scf.if %2 {
      %c0_53 = arith.constant 0 : index
      %c0_54 = arith.constant 0 : index
      %153 = vector.load %arg6[%c0_53, %c0_54] : memref<4x128xf32, #tpu.memory_space<vmem>>, vector<4x128xf32>
      %c0_55 = arith.constant 0 : index
      %c0_56 = arith.constant 0 : index
      %154 = vector.load %arg10[%c0_55, %c0_56] : memref<4x128xf32, #tpu.memory_space<vmem>>, vector<4x128xf32>
      tpu.vector_store %arg10[%c0_55, %c0_56], %153 {strides = array<i32>} : memref<4x128xf32, #tpu.memory_space<vmem>>, vector<4x128xf32>,
      %c0_57 = arith.constant 0 : index
      %c0_58 = arith.constant 0 : index
      %155 = vector.load %arg7[%c0_57, %c0_58] : memref<4x128xf32, #tpu.memory_space<vmem>>, vector<4x128xf32>
      %c0_59 = arith.constant 0 : index
      %c0_60 = arith.constant 0 : index
      %156 = vector.load %arg11[%c0_59, %c0_60] : memref<4x128xf32, #tpu.memory_space<vmem>>, vector<4x128xf32>
      tpu.vector_store %arg11[%c0_59, %c0_60], %155 {strides = array<i32>} : memref<4x128xf32, #tpu.memory_space<vmem>>, vector<4x128xf32>,
    } else {
    }
    %c0 = arith.constant 0 : index
    %c0_1 = arith.constant 0 : index
    %c0_2 = arith.constant 0 : index
    %3 = vector.load %arg2[%c0, %c0_1, %c0_2] : memref<4x4x16xf32, #tpu.memory_space<vmem>>, vector<4x4x16xf32>
    %4 = vector.shape_cast %3 : vector<4x4x16xf32> to vector<16x16xf32>
    %c0_3 = arith.constant 0 : index
    %c0_4 = arith.constant 0 : index
    %5 = vector.load %arg3[%c0_3, %c0_4] : memref<16x512xf32, #tpu.memory_space<vmem>>, vector<16x512xf32>
    %cst = arith.constant dense<0.000000e+00> : vector<16x512xf32>
    %6 = tpu.matmul %4, %5, %cst {dimension_numbers = #tpu.dot_dimension_numbers<[1], [0], [0], [1], [0, 0, 1, 1], [], []>} : vector<16x16xf32>, vector<16x512xf32>, vector<16x512xf32> -> vector<16x512xf32>
    %c0_5 = arith.constant 0 : index
    %c0_6 = arith.constant 0 : index
    %7 = vector.load %arg5[%c0_5, %c0_6] : memref<1x512xf32, #tpu.memory_space<vmem>>, vector<1x512xf32>
    %8 = vector.broadcast %7 : vector<1x512xf32> to vector<16x512xf32>
    %9 = arith.addf %6, %8 : vector<16x512xf32>
    %10 = vector.shape_cast %9 : vector<16x512xf32> to vector<4x4x512xf32>
    %c0_7 = arith.constant 0 : index
    %c0_8 = arith.constant 0 : index
    %c0_9 = arith.constant 0 : index
    %11 = vector.load %arg9[%c0_7, %c0_8, %c0_9] : memref<4x4x512xf32, #tpu.memory_space<vmem>>, vector<4x4x512xf32>
    tpu.vector_store %arg9[%c0_7, %c0_8, %c0_9], %10 {strides = array<i32>} : memref<4x4x512xf32, #tpu.memory_space<vmem>>, vector<4x4x512xf32>,
    %c0_10 = arith.constant 0 : index
    %c0_11 = arith.constant 0 : index
    %12 = vector.load %arg4[%c0_10, %c0_11] : memref<128x512xf32, #tpu.memory_space<vmem>>, vector<128x512xf32>
    %c0_12 = arith.constant 0 : index
    %c0_13 = arith.constant 0 : index
    %13 = vector.load %arg10[%c0_12, %c0_13] : memref<4x128xf32, #tpu.memory_space<vmem>>, vector<4x128xf32>
    %c0_14 = arith.constant 0 : index
    %c0_15 = arith.constant 0 : index
    %14 = vector.load %arg11[%c0_14, %c0_15] : memref<4x128xf32, #tpu.memory_space<vmem>>, vector<4x128xf32>
    %c0_i32_16 = arith.constant 0 : i32
    %15 = arith.index_cast %c0_i32_16 : i32 to index
    %c0_17 = arith.constant 0 : index
    %c0_18 = arith.constant 0 : index
    %16 = vector.load %arg9[%15, %c0_17, %c0_18] : memref<4x4x512xf32, #tpu.memory_space<vmem>>, vector<1x4x512xf32>
    %17 = vector.shape_cast %16 : vector<1x4x512xf32> to vector<4x512xf32>
    %cst_19 = arith.constant dense<0.000000e+00> : vector<4x512xf32>
    %18 = tpu.matmul %13, %12, %cst_19 {dimension_numbers = #tpu.dot_dimension_numbers<[1], [0], [0], [1], [0, 0, 1, 1], [], []>} : vector<4x128xf32>, vector<128x512xf32>, vector<4x512xf32> -> vector<4x512xf32>
    %19 = arith.addf %17, %18 : vector<4x512xf32>
    %20 = vector.extract_strided_slice %19 {offsets = [0, 0], sizes = [4, 128], strides = [1, 1]} : vector<4x512xf32> to vector<4x128xf32>
    %21 = arith.negf %20 : vector<4x128xf32>
    %22 = math.exp %21 : vector<4x128xf32>
    %cst_20 = arith.constant 1.000000e+00 : f32
    %23 = vector.broadcast %cst_20 : f32 to vector<4x128xf32>
    %24 = arith.addf %23, %22 : vector<4x128xf32>
    %25 = arith.divf %23, %24 : vector<4x128xf32>
    %26 = vector.extract_strided_slice %19 {offsets = [0, 128], sizes = [4, 128], strides = [1, 1]} : vector<4x512xf32> to vector<4x128xf32>
    %27 = arith.negf %26 : vector<4x128xf32>
    %28 = math.exp %27 : vector<4x128xf32>
    %cst_21 = arith.constant 1.000000e+00 : f32
    %29 = vector.broadcast %cst_21 : f32 to vector<4x128xf32>
    %30 = arith.addf %29, %28 : vector<4x128xf32>
    %31 = arith.divf %29, %30 : vector<4x128xf32>
    %32 = vector.extract_strided_slice %19 {offsets = [0, 256], sizes = [4, 128], strides = [1, 1]} : vector<4x512xf32> to vector<4x128xf32>
    %33 = math.tanh %32 : vector<4x128xf32>
    %34 = vector.extract_strided_slice %19 {offsets = [0, 384], sizes = [4, 128], strides = [1, 1]} : vector<4x512xf32> to vector<4x128xf32>
    %35 = arith.negf %34 : vector<4x128xf32>
    %36 = math.exp %35 : vector<4x128xf32>
    %cst_22 = arith.constant 1.000000e+00 : f32
    %37 = vector.broadcast %cst_22 : f32 to vector<4x128xf32>
    %38 = arith.addf %37, %36 : vector<4x128xf32>
    %39 = arith.divf %37, %38 : vector<4x128xf32>
    %40 = arith.mulf %31, %14 : vector<4x128xf32>
    %41 = arith.mulf %25, %33 : vector<4x128xf32>
    %42 = arith.addf %40, %41 : vector<4x128xf32>
    %43 = math.tanh %42 : vector<4x128xf32>
    %44 = arith.mulf %39, %43 : vector<4x128xf32>
    %45 = arith.index_cast %c0_i32_16 : i32 to index
    %c0_23 = arith.constant 0 : index
    %c0_24 = arith.constant 0 : index
    %46 = vector.load %arg8[%45, %c0_23, %c0_24] : memref<4x4x128xf32, #tpu.memory_space<vmem>>, vector<1x4x128xf32>
    %47 = vector.shape_cast %46 : vector<1x4x128xf32> to vector<4x128xf32>
    %48 = vector.shape_cast %44 : vector<4x128xf32> to vector<1x4x128xf32>
    tpu.vector_store %arg8[%45, %c0_23, %c0_24], %48 {strides = array<i32>} : memref<4x4x128xf32, #tpu.memory_space<vmem>>, vector<1x4x128xf32>,
    %c1_i32 = arith.constant 1 : i32
    %49 = arith.index_cast %c1_i32 : i32 to index
    %c0_25 = arith.constant 0 : index
    %c0_26 = arith.constant 0 : index
    %50 = vector.load %arg9[%49, %c0_25, %c0_26] : memref<4x4x512xf32, #tpu.memory_space<vmem>>, vector<1x4x512xf32>
    %51 = vector.shape_cast %50 : vector<1x4x512xf32> to vector<4x512xf32>
    %cst_27 = arith.constant dense<0.000000e+00> : vector<4x512xf32>
    %52 = tpu.matmul %44, %12, %cst_27 {dimension_numbers = #tpu.dot_dimension_numbers<[1], [0], [0], [1], [0, 0, 1, 1], [], []>} : vector<4x128xf32>, vector<128x512xf32>, vector<4x512xf32> -> vector<4x512xf32>
    %53 = arith.addf %51, %52 : vector<4x512xf32>
    %54 = vector.extract_strided_slice %53 {offsets = [0, 0], sizes = [4, 128], strides = [1, 1]} : vector<4x512xf32> to vector<4x128xf32>
    %55 = arith.negf %54 : vector<4x128xf32>
    %56 = math.exp %55 : vector<4x128xf32>
    %cst_28 = arith.constant 1.000000e+00 : f32
    %57 = vector.broadcast %cst_28 : f32 to vector<4x128xf32>
    %58 = arith.addf %57, %56 : vector<4x128xf32>
    %59 = arith.divf %57, %58 : vector<4x128xf32>
    %60 = vector.extract_strided_slice %53 {offsets = [0, 128], sizes = [4, 128], strides = [1, 1]} : vector<4x512xf32> to vector<4x128xf32>
    %61 = arith.negf %60 : vector<4x128xf32>
    %62 = math.exp %61 : vector<4x128xf32>
    %cst_29 = arith.constant 1.000000e+00 : f32
    %63 = vector.broadcast %cst_29 : f32 to vector<4x128xf32>
    %64 = arith.addf %63, %62 : vector<4x128xf32>
    %65 = arith.divf %63, %64 : vector<4x128xf32>
    %66 = vector.extract_strided_slice %53 {offsets = [0, 256], sizes = [4, 128], strides = [1, 1]} : vector<4x512xf32> to vector<4x128xf32>
    %67 = math.tanh %66 : vector<4x128xf32>
    %68 = vector.extract_strided_slice %53 {offsets = [0, 384], sizes = [4, 128], strides = [1, 1]} : vector<4x512xf32> to vector<4x128xf32>
    %69 = arith.negf %68 : vector<4x128xf32>
    %70 = math.exp %69 : vector<4x128xf32>
    %cst_30 = arith.constant 1.000000e+00 : f32
    %71 = vector.broadcast %cst_30 : f32 to vector<4x128xf32>
    %72 = arith.addf %71, %70 : vector<4x128xf32>
    %73 = arith.divf %71, %72 : vector<4x128xf32>
    %74 = arith.mulf %65, %42 : vector<4x128xf32>
    %75 = arith.mulf %59, %67 : vector<4x128xf32>
    %76 = arith.addf %74, %75 : vector<4x128xf32>
    %77 = math.tanh %76 : vector<4x128xf32>
    %78 = arith.mulf %73, %77 : vector<4x128xf32>
    %79 = arith.index_cast %c1_i32 : i32 to index
    %c0_31 = arith.constant 0 : index
    %c0_32 = arith.constant 0 : index
    %80 = vector.load %arg8[%79, %c0_31, %c0_32] : memref<4x4x128xf32, #tpu.memory_space<vmem>>, vector<1x4x128xf32>
    %81 = vector.shape_cast %80 : vector<1x4x128xf32> to vector<4x128xf32>
    %82 = vector.shape_cast %78 : vector<4x128xf32> to vector<1x4x128xf32>
    tpu.vector_store %arg8[%79, %c0_31, %c0_32], %82 {strides = array<i32>} : memref<4x4x128xf32, #tpu.memory_space<vmem>>, vector<1x4x128xf32>,
    %c2_i32 = arith.constant 2 : i32
    %83 = arith.index_cast %c2_i32 : i32 to index
    %c0_33 = arith.constant 0 : index
    %c0_34 = arith.constant 0 : index
    %84 = vector.load %arg9[%83, %c0_33, %c0_34] : memref<4x4x512xf32, #tpu.memory_space<vmem>>, vector<1x4x512xf32>
    %85 = vector.shape_cast %84 : vector<1x4x512xf32> to vector<4x512xf32>
    %cst_35 = arith.constant dense<0.000000e+00> : vector<4x512xf32>
    %86 = tpu.matmul %78, %12, %cst_35 {dimension_numbers = #tpu.dot_dimension_numbers<[1], [0], [0], [1], [0, 0, 1, 1], [], []>} : vector<4x128xf32>, vector<128x512xf32>, vector<4x512xf32> -> vector<4x512xf32>
    %87 = arith.addf %85, %86 : vector<4x512xf32>
    %88 = vector.extract_strided_slice %87 {offsets = [0, 0], sizes = [4, 128], strides = [1, 1]} : vector<4x512xf32> to vector<4x128xf32>
    %89 = arith.negf %88 : vector<4x128xf32>
    %90 = math.exp %89 : vector<4x128xf32>
    %cst_36 = arith.constant 1.000000e+00 : f32
    %91 = vector.broadcast %cst_36 : f32 to vector<4x128xf32>
    %92 = arith.addf %91, %90 : vector<4x128xf32>
    %93 = arith.divf %91, %92 : vector<4x128xf32>
    %94 = vector.extract_strided_slice %87 {offsets = [0, 128], sizes = [4, 128], strides = [1, 1]} : vector<4x512xf32> to vector<4x128xf32>
    %95 = arith.negf %94 : vector<4x128xf32>
    %96 = math.exp %95 : vector<4x128xf32>
    %cst_37 = arith.constant 1.000000e+00 : f32
    %97 = vector.broadcast %cst_37 : f32 to vector<4x128xf32>
    %98 = arith.addf %97, %96 : vector<4x128xf32>
    %99 = arith.divf %97, %98 : vector<4x128xf32>
    %100 = vector.extract_strided_slice %87 {offsets = [0, 256], sizes = [4, 128], strides = [1, 1]} : vector<4x512xf32> to vector<4x128xf32>
    %101 = math.tanh %100 : vector<4x128xf32>
    %102 = vector.extract_strided_slice %87 {offsets = [0, 384], sizes = [4, 128], strides = [1, 1]} : vector<4x512xf32> to vector<4x128xf32>
    %103 = arith.negf %102 : vector<4x128xf32>
    %104 = math.exp %103 : vector<4x128xf32>
    %cst_38 = arith.constant 1.000000e+00 : f32
    %105 = vector.broadcast %cst_38 : f32 to vector<4x128xf32>
    %106 = arith.addf %105, %104 : vector<4x128xf32>
    %107 = arith.divf %105, %106 : vector<4x128xf32>
    %108 = arith.mulf %99, %76 : vector<4x128xf32>
    %109 = arith.mulf %93, %101 : vector<4x128xf32>
    %110 = arith.addf %108, %109 : vector<4x128xf32>
    %111 = math.tanh %110 : vector<4x128xf32>
    %112 = arith.mulf %107, %111 : vector<4x128xf32>
    %113 = arith.index_cast %c2_i32 : i32 to index
    %c0_39 = arith.constant 0 : index
    %c0_40 = arith.constant 0 : index
    %114 = vector.load %arg8[%113, %c0_39, %c0_40] : memref<4x4x128xf32, #tpu.memory_space<vmem>>, vector<1x4x128xf32>
    %115 = vector.shape_cast %114 : vector<1x4x128xf32> to vector<4x128xf32>
    %116 = vector.shape_cast %112 : vector<4x128xf32> to vector<1x4x128xf32>
    tpu.vector_store %arg8[%113, %c0_39, %c0_40], %116 {strides = array<i32>} : memref<4x4x128xf32, #tpu.memory_space<vmem>>, vector<1x4x128xf32>,
    %c3_i32 = arith.constant 3 : i32
    %117 = arith.index_cast %c3_i32 : i32 to index
    %c0_41 = arith.constant 0 : index
    %c0_42 = arith.constant 0 : index
    %118 = vector.load %arg9[%117, %c0_41, %c0_42] : memref<4x4x512xf32, #tpu.memory_space<vmem>>, vector<1x4x512xf32>
    %119 = vector.shape_cast %118 : vector<1x4x512xf32> to vector<4x512xf32>
    %cst_43 = arith.constant dense<0.000000e+00> : vector<4x512xf32>
    %120 = tpu.matmul %112, %12, %cst_43 {dimension_numbers = #tpu.dot_dimension_numbers<[1], [0], [0], [1], [0, 0, 1, 1], [], []>} : vector<4x128xf32>, vector<128x512xf32>, vector<4x512xf32> -> vector<4x512xf32>
    %121 = arith.addf %119, %120 : vector<4x512xf32>
    %122 = vector.extract_strided_slice %121 {offsets = [0, 0], sizes = [4, 128], strides = [1, 1]} : vector<4x512xf32> to vector<4x128xf32>
    %123 = arith.negf %122 : vector<4x128xf32>
    %124 = math.exp %123 : vector<4x128xf32>
    %cst_44 = arith.constant 1.000000e+00 : f32
    %125 = vector.broadcast %cst_44 : f32 to vector<4x128xf32>
    %126 = arith.addf %125, %124 : vector<4x128xf32>
    %127 = arith.divf %125, %126 : vector<4x128xf32>
    %128 = vector.extract_strided_slice %121 {offsets = [0, 128], sizes = [4, 128], strides = [1, 1]} : vector<4x512xf32> to vector<4x128xf32>
    %129 = arith.negf %128 : vector<4x128xf32>
    %130 = math.exp %129 : vector<4x128xf32>
    %cst_45 = arith.constant 1.000000e+00 : f32
    %131 = vector.broadcast %cst_45 : f32 to vector<4x128xf32>
    %132 = arith.addf %131, %130 : vector<4x128xf32>
    %133 = arith.divf %131, %132 : vector<4x128xf32>
    %134 = vector.extract_strided_slice %121 {offsets = [0, 256], sizes = [4, 128], strides = [1, 1]} : vector<4x512xf32> to vector<4x128xf32>
    %135 = math.tanh %134 : vector<4x128xf32>
    %136 = vector.extract_strided_slice %121 {offsets = [0, 384], sizes = [4, 128], strides = [1, 1]} : vector<4x512xf32> to vector<4x128xf32>
    %137 = arith.negf %136 : vector<4x128xf32>
    %138 = math.exp %137 : vector<4x128xf32>
    %cst_46 = arith.constant 1.000000e+00 : f32
    %139 = vector.broadcast %cst_46 : f32 to vector<4x128xf32>
    %140 = arith.addf %139, %138 : vector<4x128xf32>
    %141 = arith.divf %139, %140 : vector<4x128xf32>
    %142 = arith.mulf %133, %110 : vector<4x128xf32>
    %143 = arith.mulf %127, %135 : vector<4x128xf32>
    %144 = arith.addf %142, %143 : vector<4x128xf32>
    %145 = math.tanh %144 : vector<4x128xf32>
    %146 = arith.mulf %141, %145 : vector<4x128xf32>
    %147 = arith.index_cast %c3_i32 : i32 to index
    %c0_47 = arith.constant 0 : index
    %c0_48 = arith.constant 0 : index
    %148 = vector.load %arg8[%147, %c0_47, %c0_48] : memref<4x4x128xf32, #tpu.memory_space<vmem>>, vector<1x4x128xf32>
    %149 = vector.shape_cast %148 : vector<1x4x128xf32> to vector<4x128xf32>
    %150 = vector.shape_cast %146 : vector<4x128xf32> to vector<1x4x128xf32>
    tpu.vector_store %arg8[%147, %c0_47, %c0_48], %150 {strides = array<i32>} : memref<4x4x128xf32, #tpu.memory_space<vmem>>, vector<1x4x128xf32>,
    %c4_i32 = arith.constant 4 : i32
    %c0_49 = arith.constant 0 : index
    %c0_50 = arith.constant 0 : index
    %151 = vector.load %arg10[%c0_49, %c0_50] : memref<4x128xf32, #tpu.memory_space<vmem>>, vector<4x128xf32>
    tpu.vector_store %arg10[%c0_49, %c0_50], %146 {strides = array<i32>} : memref<4x128xf32, #tpu.memory_space<vmem>>, vector<4x128xf32>,
    %c0_51 = arith.constant 0 : index
    %c0_52 = arith.constant 0 : index
    %152 = vector.load %arg11[%c0_51, %c0_52] : memref<4x128xf32, #tpu.memory_space<vmem>>, vector<4x128xf32>
    tpu.vector_store %arg11[%c0_51, %c0_52], %144 {strides = array<i32>} : memref<4x128xf32, #tpu.memory_space<vmem>>, vector<4x128xf32>,
    return
  }
  func.func @transform_0(%arg0: i32, %arg1: i32) -> (i32, i32, i32) {
    %c0_i32 = arith.constant 0 : i32
    %c0_i32_0 = arith.constant 0 : i32
    return %arg1, %arg0, %c0_i32 : i32, i32, i32
  }
  func.func @transform_1(%arg0: i32, %arg1: i32) -> (i32, i32) {
    %c0_i32 = arith.constant 0 : i32
    %c0_i32_0 = arith.constant 0 : i32
    %c0_i32_1 = arith.constant 0 : i32
    return %c0_i32, %c0_i32_0 : i32, i32
  }
  func.func @transform_2(%arg0: i32, %arg1: i32) -> (i32, i32) {
    %c0_i32 = arith.constant 0 : i32
    %c0_i32_0 = arith.constant 0 : i32
    %c0_i32_1 = arith.constant 0 : i32
    return %c0_i32, %c0_i32_0 : i32, i32
  }
  func.func @transform_3(%arg0: i32, %arg1: i32) -> (i32, i32) {
    %c0_i32 = arith.constant 0 : i32
    %c0_i32_0 = arith.constant 0 : i32
    %c0_i32_1 = arith.constant 0 : i32
    return %c0_i32, %c0_i32_0 : i32, i32
  }
  func.func @transform_4(%arg0: i32, %arg1: i32) -> (i32, i32) {
    %c0_i32 = arith.constant 0 : i32
    %c0_i32_0 = arith.constant 0 : i32
    return %arg0, %c0_i32 : i32, i32
  }
  func.func @transform_5(%arg0: i32, %arg1: i32) -> (i32, i32) {
    %c0_i32 = arith.constant 0 : i32
    %c0_i32_0 = arith.constant 0 : i32
    return %arg0, %c0_i32 : i32, i32
  }
  func.func @transform_6(%arg0: i32, %arg1: i32) -> (i32, i32, i32) {
    %c0_i32 = arith.constant 0 : i32
    %c0_i32_0 = arith.constant 0 : i32
    return %arg1, %arg0, %c0_i32 : i32, i32, i32
  }
}

</mosaic_0001>

<llo_original>
// kernel: tpu_custom_call.1
$region0: #{tpu_custom_call.1}
  #allocation0 [shape = 'u32[]', space=smem, size = 0x4, offset = 0x4, fixed_abs, tag = 'smem constant byte address 0x4 - core index']
  #allocation1 [shape = 'u32[144,128]{1,0:T(1,128)}', space=vmem, size = 0x12000, scoped, tag = 'internal scratch']
  #allocation2 [shape = 'f32[4,4,512]{2,1,0:T(4,128)}', space=vmem, size = 0x8000, scoped, tag = 'scratch operand']
  #allocation3 [shape = 'f32[4,128]{1,0:T(4,128)}', space=vmem, size = 0x800, scoped, tag = 'scratch operand']
  #allocation4 [shape = 'f32[4,128]{1,0:T(4,128)}', space=vmem, size = 0x800, scoped, tag = 'scratch operand']
  %s0 = inlined_call_operand.hbm [shape: f32[8,4,16], index: 0, kind: input, shape index: {}]
  %s1 = inlined_call_operand.hbm [shape: f32[16,512], index: 1, kind: input, shape index: {}]
  %s2 = inlined_call_operand.hbm [shape: f32[128,512], index: 2, kind: input, shape index: {}]
  %s3 = inlined_call_operand.vmem [shape: f32[1,512], index: 3, kind: input, shape index: {}]
  %s4 = inlined_call_operand.vmem [shape: f32[4,128], index: 4, kind: input, shape index: {}]
  %s5 = inlined_call_operand.vmem [shape: f32[4,128], index: 5, kind: input, shape index: {}]
  %s6 = inlined_call_operand.hbm [shape: f32[8,4,128], index: 6, kind: output, shape index: {}]
  %s7 = sld [smem:[#allocation0]]
  $region73: #{tpu_custom_call.1} parent=0
    _
  %s9 = ssub.s32 1, %s7
  %s10 = scalar_select 0, %s9, %s7
  $region1: #{tpu_custom_call.1} parent=0
    #allocation5 [shape = 'u8[16384]{0}', space=vmem, size = 0x4000, scoped, tag = 'input window, operand 0']
    #allocation6 [shape = 's32[2]{0}', space=sflag, size = 0x8, scoped, tag = 'scoped memory for tpu_custom_call.1']
    #allocation7 [shape = 's32[2]{0}', space=sflag, size = 0x8, scoped, tag = 'scoped memory for tpu_custom_call.1']
    #allocation8 [shape = 'u8[32768]{0}', space=vmem, size = 0x8000, scoped, tag = 'input window, operand 1, single buffered']
    #allocation9 [shape = 's32[1]{0}', space=sflag, size = 0x4, scoped, tag = 'scoped memory for tpu_custom_call.1']
    #allocation10 [shape = 'u8[262144]{0}', space=vmem, size = 0x40000, scoped, tag = 'input window, operand 2, single buffered']
    #allocation11 [shape = 'u8[16384]{0}', space=vmem, size = 0x4000, scoped, tag = 'output window, operand 0']
    %11 = vsyncpa [#allocation6], 0
    %s12 = scalar_lea.sflag [#allocation6], 1
    %13 = vsyncpa %s12, 0
    %14 = vsyncpa [#allocation9], 0
    %15 = vsyncpa [#allocation7], 0
    %s16 = scalar_lea.sflag [#allocation7], 1
    %17 = vsyncpa %s16, 0
    loop: start=0, step=1, limit=4
    $region2: #{tpu_custom_call.1} parent=1 // loop_pre_header
      _
    $region3: #{tpu_custom_call.1} parent=1 // loop_header
      %s19 = sphi 0, %s23
      %p20 = scmp.ge.s32.totalorder %s19, 4
      %s26 = sphi 0, %s38
      %s27 = sphi 0, %s34
      %s28 = sphi 0, %s26
      %s29 = sphi 0, %s27
      %s30 = sphi 0, %s28
      %s31 = sphi 0, %s29
      %s43 = sphi 0, %s45
      %s46 = sphi 0, %s43
      %s47 = sphi 0, %s46
      %s63 = sphi 0, %s47
      %s67 = sphi 0, %s67
      %s69 = sphi 0, %s67
      %s70 = sphi 0, %s69
      %s84 = sphi 0, %s70
      %s88 = sphi 0, %s88
      %s90 = sphi 0, %s88
      %s91 = sphi 0, %s90
      %s105 = sphi 0, %s91
      %s109 = sphi 0, %s109
      %s111 = sphi 0, %s109
      %s112 = sphi 0, %s111
      %s126 = sphi 0, %s112
      %s132 = sphi 0, %s134
      %s135 = sphi 0, %s132
      %s136 = sphi 0, %s135
      %s152 = sphi 0, %s136
      %s158 = sphi 0, %s160
      %s161 = sphi 0, %s158
      %s162 = sphi 0, %s161
      %s178 = sphi 0, %s162
      %s186 = sphi 0, %s188
      %s189 = sphi 0, %s186
      %s190 = sphi 0, %s189
      %s206 = sphi 0, %s190
    $region4: #{tpu_custom_call.1} parent=1 // loop_header_branch
      %22 = sbr.rel (%p20) target = $region8
    $region5: #{tpu_custom_call.1} parent=1 // loop_body
      %s24 = ssub.s32 %s19, 1
      %s25 = ssub.s32 %s19, 2
      %s32 = sadd.s32 1, %s27
      %p33 = scmp.ge.s32.totalorder %s32, 2
      %s34 = scalar_select %p33, 0, %s32
      %s35 = sadd.s32 1, %s26
      %s36 = scalar_select %p33, %s35, %s26
      %p37 = scmp.ge.s32.totalorder %s36, 1
      %s38 = scalar_select %p37, 0, %s36
      %s39 = ssub.s32 %s27, %s34
      %s40 = ssub.s32 %s26, %s38
      %s41 = sor.u32 %s39, %s40
      %p42 = scmp.eq.s32.totalorder %s41, 0
      %s44 = sadd.s32 %s43, 1
      %s45 = scalar_select %p42, %s43, %s44
      %p48 = pneg %p42
      %p49 = scmp.eq.s32.totalorder %s19, 1
      %p50 = por %p48, %p49
      %p51 = scmp.ne.s32.totalorder %s43, %s46
      %p52 = scmp.eq.s32.totalorder %s19, 0
      %p53 = por %p51, %p52
      %p54 = scmp.ne.s32.totalorder %s43, %s46
      %p55 = scmp.eq.s32.totalorder %s24, 1
      %p56 = por %p54, %p55
      %p57 = scmp.ne.s32.totalorder %s46, %s47
      %p58 = scmp.eq.s32.totalorder %s24, 0
      %p59 = por %p57, %p58
      %p60 = scmp.ne.s32.totalorder %s46, %s47
      %p61 = scmp.eq.s32.totalorder %s25, 1
      %p62 = por %p60, %p61
      %p64 = scmp.ne.s32.totalorder %s47, %s63
      %p65 = scmp.eq.s32.totalorder %s25, 0
      %p66 = por %p64, %p65
      %s68 = sadd.s32 %s67, 1
      %p71 = scmp.eq.s32.totalorder %s19, 1
      %p72 = scmp.ne.s32.totalorder %s67, %s69
      %p73 = scmp.eq.s32.totalorder %s19, 0
      %p74 = por %p72, %p73
      %p75 = scmp.ne.s32.totalorder %s67, %s69
      %p76 = scmp.eq.s32.totalorder %s24, 1
      %p77 = por %p75, %p76
      %p78 = scmp.ne.s32.totalorder %s69, %s70
      %p79 = scmp.eq.s32.totalorder %s24, 0
      %p80 = por %p78, %p79
      %p81 = scmp.ne.s32.totalorder %s69, %s70
      %p82 = scmp.eq.s32.totalorder %s25, 1
      %p83 = por %p81, %p82
      %p85 = scmp.ne.s32.totalorder %s70, %s84
      %p86 = scmp.eq.s32.totalorder %s25, 0
      %p87 = por %p85, %p86
      %s89 = sadd.s32 %s88, 1
      %p92 = scmp.eq.s32.totalorder %s19, 1
      %p93 = scmp.ne.s32.totalorder %s88, %s90
      %p94 = scmp.eq.s32.totalorder %s19, 0
      %p95 = por %p93, %p94
      %p96 = scmp.ne.s32.totalorder %s88, %s90
      %p97 = scmp.eq.s32.totalorder %s24, 1
      %p98 = por %p96, %p97
      %p99 = scmp.ne.s32.totalorder %s90, %s91
      %p100 = scmp.eq.s32.totalorder %s24, 0
      %p101 = por %p99, %p100
      %p102 = scmp.ne.s32.totalorder %s90, %s91
      %p103 = scmp.eq.s32.totalorder %s25, 1
      %p104 = por %p102, %p103
      %p106 = scmp.ne.s32.totalorder %s91, %s105
      %p107 = scmp.eq.s32.totalorder %s25, 0
      %p108 = por %p106, %p107
      %s110 = sadd.s32 %s109, 1
      %p113 = scmp.eq.s32.totalorder %s19, 1
      %p114 = scmp.ne.s32.totalorder %s109, %s111
      %p115 = scmp.eq.s32.totalorder %s19, 0
      %p116 = por %p114, %p115
      %p117 = scmp.ne.s32.totalorder %s109, %s111
      %p118 = scmp.eq.s32.totalorder %s24, 1
      %p119 = por %p117, %p118
      %p120 = scmp.ne.s32.totalorder %s111, %s112
      %p121 = scmp.eq.s32.totalorder %s24, 0
      %p122 = por %p120, %p121
      %p123 = scmp.ne.s32.totalorder %s111, %s112
      %p124 = scmp.eq.s32.totalorder %s25, 1
      %p125 = por %p123, %p124
      %p127 = scmp.ne.s32.totalorder %s112, %s126
      %p128 = scmp.eq.s32.totalorder %s25, 0
      %p129 = por %p127, %p128
      %s130 = ssub.s32 %s26, %s38
      %p131 = scmp.eq.s32.totalorder %s130, 0
      %s133 = sadd.s32 %s132, 1
      %s134 = scalar_select %p131, %s132, %s133
      %p137 = pneg %p131
      %p138 = scmp.eq.s32.totalorder %s19, 1
      %p139 = por %p137, %p138
      %p140 = scmp.ne.s32.totalorder %s132, %s135
      %p141 = scmp.eq.s32.totalorder %s19, 0
      %p142 = por %p140, %p141
      %p143 = scmp.ne.s32.totalorder %s132, %s135
      %p144 = scmp.eq.s32.totalorder %s24, 1
      %p145 = por %p143, %p144
      %p146 = scmp.ne.s32.totalorder %s135, %s136
      %p147 = scmp.eq.s32.totalorder %s24, 0
      %p148 = por %p146, %p147
      %p149 = scmp.ne.s32.totalorder %s135, %s136
      %p150 = scmp.eq.s32.totalorder %s25, 1
      %p151 = por %p149, %p150
      %p153 = scmp.ne.s32.totalorder %s136, %s152
      %p154 = scmp.eq.s32.totalorder %s25, 0
      %p155 = por %p153, %p154
      %s156 = ssub.s32 %s26, %s38
      %p157 = scmp.eq.s32.totalorder %s156, 0
      %s159 = sadd.s32 %s158, 1
      %s160 = scalar_select %p157, %s158, %s159
      %p163 = pneg %p157
      %p164 = scmp.eq.s32.totalorder %s19, 1
      %p165 = por %p163, %p164
      %p166 = scmp.ne.s32.totalorder %s158, %s161
      %p167 = scmp.eq.s32.totalorder %s19, 0
      %p168 = por %p166, %p167
      %p169 = scmp.ne.s32.totalorder %s158, %s161
      %p170 = scmp.eq.s32.totalorder %s24, 1
      %p171 = por %p169, %p170
      %p172 = scmp.ne.s32.totalorder %s161, %s162
      %p173 = scmp.eq.s32.totalorder %s24, 0
      %p174 = por %p172, %p173
      %p175 = scmp.ne.s32.totalorder %s161, %s162
      %p176 = scmp.eq.s32.totalorder %s25, 1
      %p177 = por %p175, %p176
      %p179 = scmp.ne.s32.totalorder %s162, %s178
      %p180 = scmp.eq.s32.totalorder %s25, 0
      %p181 = por %p179, %p180
      %s182 = ssub.s32 %s27, %s34
      %s183 = ssub.s32 %s26, %s38
      %s184 = sor.u32 %s182, %s183
      %p185 = scmp.eq.s32.totalorder %s184, 0
      %s187 = sadd.s32 %s186, 1
      %s188 = scalar_select %p185, %s186, %s187
      %p191 = pneg %p185
      %p192 = scmp.eq.s32.totalorder %s19, 1
      %p193 = por %p191, %p192
      %p194 = scmp.ne.s32.totalorder %s186, %s189
      %p195 = scmp.eq.s32.totalorder %s19, 0
      %p196 = por %p194, %p195
      %p197 = scmp.ne.s32.totalorder %s186, %s189
      %p198 = scmp.eq.s32.totalorder %s24, 1
      %p199 = por %p197, %p198
      %p200 = scmp.ne.s32.totalorder %s189, %s190
      %p201 = scmp.eq.s32.totalorder %s24, 0
      %p202 = por %p200, %p201
      %p203 = scmp.ne.s32.totalorder %s189, %s190
      %p204 = scmp.eq.s32.totalorder %s25, 1
      %p205 = por %p203, %p204
      %p207 = scmp.ne.s32.totalorder %s190, %s206
      %p208 = scmp.eq.s32.totalorder %s25, 0
      %p209 = por %p207, %p208
      %p210 = scmp.le.s32.totalorder 1, %s19
      %p211 = scmp.lt.s32.totalorder %s19, 3
      %p212 = pnand %p210, %p211
      %p213 = pneg %p212
      // Predicated region
      $region9: #{tpu_custom_call.1} parent=5 // pred_check
        _
      $region10: #{tpu_custom_call.1} parent=5 // pred_check_branch
        %215 = sbr.rel (%p212) target = $region12
      $region11: #{tpu_custom_call.1} parent=5 // pred_region
        %s216 = ssub.s32 %s19, 1
        // Predicated region
        $region13: #{tpu_custom_call.1} parent=11 // pred_check
          %p217 = pneg %p80
        $region14: #{tpu_custom_call.1} parent=11 // pred_check_branch
          %219 = sbr.rel (%p217) target = $region16
        $region15: #{tpu_custom_call.1} parent=11 // pred_region
          %s221 = ssub.s32 1024, 1024
          %222 = vsyncadd [#allocation9], %s221
          %s223 = sshll.u32 [#allocation8], 4
          %s224 = int_to_ptr.vmem [resolvable:$true] %s223
          %229 = dma.hbm_to_vmem [thread:$0]  %s1, 1024, %s224, [#allocation9], 512, 512, 32
        $region16: #{tpu_custom_call.1} parent=11 // pred_fallthru
          _
        // Predicated region
        $region17: #{tpu_custom_call.1} parent=11 // pred_check
          %p230 = pneg %p101
        $region18: #{tpu_custom_call.1} parent=11 // pred_check_branch
          %232 = sbr.rel (%p230) target = $region20
        $region19: #{tpu_custom_call.1} parent=11 // pred_region
          %s234 = ssub.s32 8192, 8192
          %235 = vsyncadd [#allocation9], %s234
          %s236 = sshll.u32 [#allocation10], 4
          %s237 = int_to_ptr.vmem [resolvable:$true] %s236
          %242 = dma.hbm_to_vmem [thread:$0]  %s2, 8192, %s237, [#allocation9], 512, 512, 32
        $region20: #{tpu_custom_call.1} parent=11 // pred_fallthru
          _
        // Predicated region
        $region21: #{tpu_custom_call.1} parent=11 // pred_check
          %p243 = pneg %p122
        $region22: #{tpu_custom_call.1} parent=11 // pred_check_branch
          %245 = sbr.rel (%p243) target = $region24
        $region23: #{tpu_custom_call.1} parent=11 // pred_region
          _
        $region24: #{tpu_custom_call.1} parent=11 // pred_fallthru
          _
        // Predicated region
        $region25: #{tpu_custom_call.1} parent=11 // pred_check
          %p246 = pneg %p148
        $region26: #{tpu_custom_call.1} parent=11 // pred_check_branch
          %248 = sbr.rel (%p246) target = $region28
        $region27: #{tpu_custom_call.1} parent=11 // pred_region
          %p249 = scmp.lt.s32.totalorder %s28, 0
          %s250 = scalar_select %p249, %s28, 0
          %s251 = smul.addr %s250, 4
          %s252 = scalar_lea.vmem %s4, %s251
        $region28: #{tpu_custom_call.1} parent=11 // pred_fallthru
          _
        // Predicated region
        $region29: #{tpu_custom_call.1} parent=11 // pred_check
          %p253 = pneg %p174
        $region30: #{tpu_custom_call.1} parent=11 // pred_check_branch
          %255 = sbr.rel (%p253) target = $region32
        $region31: #{tpu_custom_call.1} parent=11 // pred_region
          %p256 = scmp.lt.s32.totalorder %s28, 0
          %s257 = scalar_select %p256, %s28, 0
          %s258 = smul.addr %s257, 4
          %s259 = scalar_lea.vmem %s5, %s258
        $region32: #{tpu_custom_call.1} parent=11 // pred_fallthru
          _
      $region12: #{tpu_custom_call.1} parent=5 // pred_fallthru
        _
      %p260 = scmp.lt.s32.totalorder %s19, 2
      // Predicated region
      $region33: #{tpu_custom_call.1} parent=5 // pred_check
        %p261 = pneg %p260
      $region34: #{tpu_custom_call.1} parent=5 // pred_check_branch
        %263 = sbr.rel (%p261) target = $region36
      $region35: #{tpu_custom_call.1} parent=5 // pred_region
        // Predicated region
        $region37: #{tpu_custom_call.1} parent=35 // pred_check
          %p264 = pneg %p53
        $region38: #{tpu_custom_call.1} parent=35 // pred_check_branch
          %266 = sbr.rel (%p264) target = $region40
        $region39: #{tpu_custom_call.1} parent=35 // pred_region
          %s267 = sand.u32 %s43, 1
          %s268 = scalar_lea.sflag [#allocation6], %s267
          %s269 = sand.u32 %s43, 1
          %s270 = smul.addr %s269, 16
          %s271 = scalar_lea.vmem [#allocation5], %s270
          %s272 = smul.u32 4, %s27
          %s274 = ssub.s32 256, 256
          %275 = vsyncadd %s268, %s274
          %s276 = sadd.s32 %s26, %s272
          %s277 = smul.addr %s276, 64
          %s278 = scalar_lea.hbm %s0, %s277
          %s279 = sshll.u32 %s271, 4
          %s280 = int_to_ptr.vmem [resolvable:$true] %s279
          %285 = dma.hbm_to_vmem [thread:$0]  %s278, 256, %s280, %s268, 64, 64, 4
        $region40: #{tpu_custom_call.1} parent=35 // pred_fallthru
          _
      $region36: #{tpu_custom_call.1} parent=5 // pred_fallthru
        _
      %p286 = scmp.le.s32.totalorder 1, %s19
      %p287 = scmp.lt.s32.totalorder %s19, 3
      %p288 = pnand %p286, %p287
      %p289 = pneg %p288
      // Predicated region
      $region41: #{tpu_custom_call.1} parent=5 // pred_check
        _
      $region42: #{tpu_custom_call.1} parent=5 // pred_check_branch
        %291 = sbr.rel (%p288) target = $region44
      $region43: #{tpu_custom_call.1} parent=5 // pred_region
        %s292 = ssub.s32 %s19, 1
        %s293 = sand.u32 %s46, 1
        %s294 = scalar_lea.sflag [#allocation6], %s293
        %s295 = sand.u32 %s46, 1
        %s296 = smul.addr %s295, 16
        %s297 = scalar_lea.vmem [#allocation5], %s296
        // Predicated region
        $region45: #{tpu_custom_call.1} parent=43 // pred_check
          %p298 = pneg %p59
        $region46: #{tpu_custom_call.1} parent=43 // pred_check_branch
          %300 = sbr.rel (%p298) target = $region48
        $region47: #{tpu_custom_call.1} parent=43 // pred_region
          %301 = dma.done %s294, 256
        $region48: #{tpu_custom_call.1} parent=43 // pred_fallthru
          _
        // Predicated region
        $region49: #{tpu_custom_call.1} parent=43 // pred_check
          %p302 = pneg %p80
        $region50: #{tpu_custom_call.1} parent=43 // pred_check_branch
          %304 = sbr.rel (%p302) target = $region52
        $region51: #{tpu_custom_call.1} parent=43 // pred_region
          %305 = dma.done [#allocation9], 1024
        $region52: #{tpu_custom_call.1} parent=43 // pred_fallthru
          _
        // Predicated region
        $region53: #{tpu_custom_call.1} parent=43 // pred_check
          %p306 = pneg %p101
        $region54: #{tpu_custom_call.1} parent=43 // pred_check_branch
          %308 = sbr.rel (%p306) target = $region56
        $region55: #{tpu_custom_call.1} parent=43 // pred_region
          %309 = dma.done [#allocation9], 8192
        $region56: #{tpu_custom_call.1} parent=43 // pred_fallthru
          _
        %s310 = sand.u32 %s46, 1
        %s311 = scalar_lea.sflag [#allocation6], %s310
        %s312 = sand.u32 %s46, 1
        %s313 = smul.addr %s312, 16
        %s314 = scalar_lea.vmem [#allocation5], %s313
        %p315 = pneg %p59
        %p316 = pneg %p56
        %p317 = pneg %p80
        %p318 = pneg %p77
        %p319 = pneg %p101
        %p320 = pneg %p98
        %p321 = pneg %p122
        %p322 = pneg %p119
        %p323 = scmp.lt.s32.totalorder %s28, 0
        %s324 = scalar_select %p323, %s28, 0
        %s325 = smul.addr %s324, 4
        %s326 = scalar_lea.vmem %s4, %s325
        %p327 = pneg %p148
        %p328 = pneg %p145
        %p329 = scmp.lt.s32.totalorder %s28, 0
        %s330 = scalar_select %p329, %s28, 0
        %s331 = smul.addr %s330, 4
        %s332 = scalar_lea.vmem %s5, %s331
        %p333 = pneg %p174
        %p334 = pneg %p171
        %p335 = pneg %p202
        %p336 = pneg %p199
        %s337 = sand.u32 %s189, 1
        %s338 = scalar_lea.sflag [#allocation7], %s337
        %s339 = sand.u32 %s189, 1
        %s340 = smul.addr %s339, 16
        %s341 = scalar_lea.vmem [#allocation11], %s340
        %s342 = smul.u32 4, %s29
        %p343 = scmp.lt.s32.totalorder %s28, 0
        %s344 = scalar_select %p343, %s28, 0
        %s345 = smul.addr %s344, 4
        %s346 = scalar_lea.vmem %s4, %s345
        %p347 = scmp.lt.s32.totalorder %s28, 0
        %s348 = scalar_select %p347, %s28, 0
        %s349 = smul.addr %s348, 4
        %s350 = scalar_lea.vmem %s5, %s349
        %s351 = smul.u32 4, %s29
        %p352 = scmp.eq.s32.totalorder %s29, 0
        // Predicated region
        $region57: #{tpu_custom_call.1} parent=43 // pred_check
          %p353 = pneg %p352
        $region58: #{tpu_custom_call.1} parent=43 // pred_check_branch
          %355 = sbr.rel (%p353) target = $region60
        $region59: #{tpu_custom_call.1} parent=43 // pred_region
          %v356 = vld [vmem:[%s346] sm:$0xf]
          %357 = vst [vmem:[#allocation3] sm:$0xf] %v356
          %v358 = vld [vmem:[%s350] sm:$0xf]
          %359 = vst [vmem:[#allocation4] sm:$0xf] %v358
        $region60: #{tpu_custom_call.1} parent=43 // pred_fallthru
          _
        %v360 = vld [vmem:[%s297] sm:$0xf]
        %v361 = vld [vmem:[%s297 + $0x4] sm:$0xf]
        %v362 = vld [vmem:[%s297 + $0x8] sm:$0xf]
        %v363 = vld [vmem:[%s297 + $0xc] sm:$0xf]
        %v364 = vld [vmem:[#allocation8] sm:$0xff]
        %v365 = vld [vmem:[#allocation8 + $0x8] sm:$0xff]
        %v366 = vld [vmem:[#allocation8 + $0x10] sm:$0xff]
        %v367 = vld [vmem:[#allocation8 + $0x18] sm:$0xff]
        %v368 = vld [vmem:[#allocation8 + $0x20] sm:$0xff]
        %v369 = vld [vmem:[#allocation8 + $0x28] sm:$0xff]
        %v370 = vld [vmem:[#allocation8 + $0x30] sm:$0xff]
        %v371 = vld [vmem:[#allocation8 + $0x38] sm:$0xff]
        %v372 = vld [vmem:[%s3] sm:$0xf]
        %v374 = vlaneseq
        %v375 = vshrl.u32 %v374, 7
        %v376 = vsub.s32 0, %v375
        %v377 = vrot.slane %v372, %v376
        %v378 = vlaneseq
        %v379 = vshrl.u32 %v378, 7
        %v380 = vsub.s32 1, %v379
        %v381 = vrot.slane %v372, %v380
        %v382 = vlaneseq
        %v383 = vshrl.u32 %v382, 7
        %v384 = vsub.s32 2, %v383
        %v385 = vrot.slane %v372, %v384
        %v386 = vlaneseq
        %v387 = vshrl.u32 %v386, 7
        %v388 = vsub.s32 3, %v387
        %v389 = vrot.slane %v372, %v388
        %v398 = vcombine.low %v360, %v361
        %v399 = vcombine.low %v362, %v363
        %vm400 = vcmask 130048
        %v401 = vsel %vm400, %v398, 0
        %v403 = vsel %vm400, %v399, 0
        %405 = vmatprep.subr.mxu0 %v365
        %406 = vmatpush1.msra.mxu0 %v364
        %407 = vmatprep.subr.mxu0 %v369
        %408 = vmatpush1.msra.mxu0 %v368
        %409 = vmatprep.subr.mxu0 0.0
        %410 = vmatpush1.msra.mxu0 0.0
        %411 = vmatprep.subr.mxu0 0.0
        %412 = vmatpush1.msra.mxu0 0.0
        %413 = vmatprep.subr.mxu0 0.0
        %414 = vmatpush1.msra.mxu0 0.0
        %415 = vmatprep.subr.mxu0 0.0
        %416 = vmatpush1.msra.mxu0 0.0
        %417 = vmatprep.subr.mxu0 0.0
        %418 = vmatpush1.msra.mxu0 0.0
        %419 = vmatprep.subr.mxu0 0.0
        %420 = vmatpush1.msra.mxu0 0.0
        %421 = vmatprep.subr.mxu0 0.0
        %422 = vmatpush1.msra.mxu0 0.0
        %423 = vmatprep.subr.mxu0 0.0
        %424 = vmatpush1.msra.mxu0 0.0
        %425 = vmatprep.subr.mxu0 0.0
        %426 = vmatpush1.msra.mxu0 0.0
        %427 = vmatprep.subr.mxu0 0.0
        %428 = vmatpush1.msra.mxu0 0.0
        %429 = vmatprep.subr.mxu0 0.0
        %430 = vmatpush1.msra.mxu0 0.0
        %431 = vmatprep.subr.mxu0 0.0
        %432 = vmatpush1.msra.mxu0 0.0
        %433 = vmatprep.subr.mxu0 0.0
        %434 = vmatpush1.msra.mxu0 0.0
        %435 = vmatprep.subr.mxu0 0.0
        %436 = vmatpush1.msra.mxu0 0.0
        %437 = vmatprep.subr.mxu0 0.0
        %438 = vmatpush1.msra.mxu0 0.0
        %439 = vmatprep.subr.mxu0 0.0
        %440 = vmatpush1.msra.mxu0 0.0
        %441 = vmatprep.subr.mxu0 0.0
        %442 = vmatpush1.msra.mxu0 0.0
        %443 = vmatprep.subr.mxu0 0.0
        %444 = vmatpush1.msra.mxu0 0.0
        %445 = vmatprep.subr.mxu0 0.0
        %446 = vmatpush1.msra.mxu0 0.0
        %447 = vmatprep.subr.mxu0 0.0
        %448 = vmatpush1.msra.mxu0 0.0
        %449 = vmatprep.subr.mxu0 0.0
        %450 = vmatpush1.msra.mxu0 0.0
        %451 = vmatprep.subr.mxu0 0.0
        %452 = vmatpush1.msra.mxu0 0.0
        %453 = vmatprep.subr.mxu0 0.0
        %454 = vmatpush1.msra.mxu0 0.0
        %455 = vmatprep.subr.mxu0 0.0
        %456 = vmatpush1.msra.mxu0 0.0
        %457 = vmatprep.subr.mxu0 0.0
        %458 = vmatpush1.msra.mxu0 0.0
        %459 = vmatprep.subr.mxu0 0.0
        %460 = vmatpush1.msra.mxu0 0.0
        %461 = vmatprep.subr.mxu0 0.0
        %462 = vmatpush1.msra.mxu0 0.0
        %463 = vmatprep.subr.mxu0 0.0
        %464 = vmatpush1.msra.mxu0 0.0
        %465 = vmatprep.subr.mxu0 0.0
        %466 = vmatpush1.msra.mxu0 0.0
        %467 = vmatprep.subr.mxu0 0.0
        %468 = vmatpush1.msra.mxu0 0.0
        %469 = vmatprep.mubr.f32.mxu0 0.0
        %470 = vmatmul.mubr.f32.gmra.mrb[0].mxu0 %v401
        %v471 = vpop.f32.mrb[0].mxu0
        %v472 = vadd.f32 %v377, %v471
        %v473 = vpop.f32.mrb[0].mxu0
        %v474 = vadd.f32 %v381, %v473
        %475 = vmatprep.mubr.f32.mxu0 0.0
        %476 = vmatmul.mubr.f32.gmra.mrb[0].mxu0 %v403
        %v477 = vpop.f32.mrb[0].mxu0
        %v478 = vadd.f32 %v377, %v477
        %v479 = vpop.f32.mrb[0].mxu0
        %v480 = vadd.f32 %v381, %v479
        %481 = vdwg.mxu0
        %482 = vmatprep.subr.mxu0 %v367
        %483 = vmatpush1.msra.mxu0 %v366
        %484 = vmatprep.subr.mxu0 %v371
        %485 = vmatpush1.msra.mxu0 %v370
        %486 = vmatprep.subr.mxu0 0.0
        %487 = vmatpush1.msra.mxu0 0.0
        %488 = vmatprep.subr.mxu0 0.0
        %489 = vmatpush1.msra.mxu0 0.0
        %490 = vmatprep.subr.mxu0 0.0
        %491 = vmatpush1.msra.mxu0 0.0
        %492 = vmatprep.subr.mxu0 0.0
        %493 = vmatpush1.msra.mxu0 0.0
        %494 = vmatprep.subr.mxu0 0.0
        %495 = vmatpush1.msra.mxu0 0.0
        %496 = vmatprep.subr.mxu0 0.0
        %497 = vmatpush1.msra.mxu0 0.0
        %498 = vmatprep.subr.mxu0 0.0
        %499 = vmatpush1.msra.mxu0 0.0
        %500 = vmatprep.subr.mxu0 0.0
        %501 = vmatpush1.msra.mxu0 0.0
        %502 = vmatprep.subr.mxu0 0.0
        %503 = vmatpush1.msra.mxu0 0.0
        %504 = vmatprep.subr.mxu0 0.0
        %505 = vmatpush1.msra.mxu0 0.0
        %506 = vmatprep.subr.mxu0 0.0
        %507 = vmatpush1.msra.mxu0 0.0
        %508 = vmatprep.subr.mxu0 0.0
        %509 = vmatpush1.msra.mxu0 0.0
        %510 = vmatprep.subr.mxu0 0.0
        %511 = vmatpush1.msra.mxu0 0.0
        %512 = vmatprep.subr.mxu0 0.0
        %513 = vmatpush1.msra.mxu0 0.0
        %514 = vmatprep.subr.mxu0 0.0
        %515 = vmatpush1.msra.mxu0 0.0
        %516 = vmatprep.subr.mxu0 0.0
        %517 = vmatpush1.msra.mxu0 0.0
        %518 = vmatprep.subr.mxu0 0.0
        %519 = vmatpush1.msra.mxu0 0.0
        %520 = vmatprep.subr.mxu0 0.0
        %521 = vmatpush1.msra.mxu0 0.0
        %522 = vmatprep.subr.mxu0 0.0
        %523 = vmatpush1.msra.mxu0 0.0
        %524 = vmatprep.subr.mxu0 0.0
        %525 = vmatpush1.msra.mxu0 0.0
        %526 = vmatprep.subr.mxu0 0.0
        %527 = vmatpush1.msra.mxu0 0.0
        %528 = vmatprep.subr.mxu0 0.0
        %529 = vmatpush1.msra.mxu0 0.0
        %530 = vmatprep.subr.mxu0 0.0
        %531 = vmatpush1.msra.mxu0 0.0
        %532 = vmatprep.subr.mxu0 0.0
        %533 = vmatpush1.msra.mxu0 0.0
        %534 = vmatprep.subr.mxu0 0.0
        %535 = vmatpush1.msra.mxu0 0.0
        %536 = vmatprep.subr.mxu0 0.0
        %537 = vmatpush1.msra.mxu0 0.0
        %538 = vmatprep.subr.mxu0 0.0
        %539 = vmatpush1.msra.mxu0 0.0
        %540 = vmatprep.subr.mxu0 0.0
        %541 = vmatpush1.msra.mxu0 0.0
        %542 = vmatprep.subr.mxu0 0.0
        %543 = vmatpush1.msra.mxu0 0.0
        %544 = vmatprep.subr.mxu0 0.0
        %545 = vmatpush1.msra.mxu0 0.0
        %546 = vmatprep.mubr.f32.mxu0 0.0
        %547 = vmatmul.mubr.f32.gmra.mrb[0].mxu0 %v401
        %v548 = vpop.f32.mrb[0].mxu0
        %v549 = vadd.f32 %v385, %v548
        %v550 = vpop.f32.mrb[0].mxu0
        %v551 = vadd.f32 %v389, %v550
        %552 = vmatprep.mubr.f32.mxu0 0.0
        %553 = vmatmul.mubr.f32.gmra.mrb[0].mxu0 %v403
        %v554 = vpop.f32.mrb[0].mxu0
        %v555 = vadd.f32 %v385, %v554
        %v556 = vpop.f32.mrb[0].mxu0
        %v557 = vadd.f32 %v389, %v556
        %558 = vdwg.mxu0
        %v567 = vcombine.low %v472, %v474
        %v568 = vcombine.high %v472, %v474
        %v569 = vcombine.low %v549, %v551
        %v570 = vcombine.high %v549, %v551
        %v571 = vcombine.low %v478, %v480
        %v572 = vcombine.high %v478, %v480
        %v573 = vcombine.low %v555, %v557
        %v574 = vcombine.high %v555, %v557
        %583 = vst [vmem:[#allocation2] sm:$0xff] %v567
        %584 = vst [vmem:[#allocation2 + $0x8] sm:$0xff] %v569
        %585 = vst [vmem:[#allocation2 + $0x10] sm:$0xff] %v568
        %586 = vst [vmem:[#allocation2 + $0x18] sm:$0xff] %v570
        %587 = vst [vmem:[#allocation2 + $0x20] sm:$0xff] %v571
        %588 = vst [vmem:[#allocation2 + $0x28] sm:$0xff] %v573
        %589 = vst [vmem:[#allocation2 + $0x30] sm:$0xff] %v572
        %590 = vst [vmem:[#allocation2 + $0x38] sm:$0xff] %v574
        %v591 = vld [vmem:[#allocation10] sm:$0xff]
        %v592 = vld [vmem:[#allocation10 + $0x8] sm:$0xff]
        %v593 = vld [vmem:[#allocation10 + $0x10] sm:$0xff]
        %v594 = vld [vmem:[#allocation10 + $0x18] sm:$0xff]
        %v595 = vld [vmem:[#allocation10 + $0x20] sm:$0xff]
        %v596 = vld [vmem:[#allocation10 + $0x28] sm:$0xff]
        %v597 = vld [vmem:[#allocation10 + $0x30] sm:$0xff]
        %v598 = vld [vmem:[#allocation10 + $0x38] sm:$0xff]
        %v599 = vld [vmem:[#allocation10 + $0x40] sm:$0xff]
        %v600 = vld [vmem:[#allocation10 + $0x48] sm:$0xff]
        %v601 = vld [vmem:[#allocation10 + $0x50] sm:$0xff]
        %v602 = vld [vmem:[#allocation10 + $0x58] sm:$0xff]
        %v603 = vld [vmem:[#allocation10 + $0x60] sm:$0xff]
        %v604 = vld [vmem:[#allocation10 + $0x68] sm:$0xff]
        %v605 = vld [vmem:[#allocation10 + $0x70] sm:$0xff]
        %v606 = vld [vmem:[#allocation10 + $0x78] sm:$0xff]
        %v607 = vld [vmem:[#allocation10 + $0x80] sm:$0xff]
        %v608 = vld [vmem:[#allocation10 + $0x88] sm:$0xff]
        %v609 = vld [vmem:[#allocation10 + $0x90] sm:$0xff]
        %v610 = vld [vmem:[#allocation10 + $0x98] sm:$0xff]
        %v611 = vld [vmem:[#allocation10 + $0xa0] sm:$0xff]
        %v612 = vld [vmem:[#allocation10 + $0xa8] sm:$0xff]
        %v613 = vld [vmem:[#allocation10 + $0xb0] sm:$0xff]
        %v614 = vld [vmem:[#allocation10 + $0xb8] sm:$0xff]
        %v615 = vld [vmem:[#allocation10 + $0xc0] sm:$0xff]
        %v616 = vld [vmem:[#allocation10 + $0xc8] sm:$0xff]
        %v617 = vld [vmem:[#allocation10 + $0xd0] sm:$0xff]
        %v618 = vld [vmem:[#allocation10 + $0xd8] sm:$0xff]
        %v619 = vld [vmem:[#allocation10 + $0xe0] sm:$0xff]
        %v620 = vld [vmem:[#allocation10 + $0xe8] sm:$0xff]
        %v621 = vld [vmem:[#allocation10 + $0xf0] sm:$0xff]
        %v622 = vld [vmem:[#allocation10 + $0xf8] sm:$0xff]
        %v623 = vld [vmem:[#allocation10 + $0x100] sm:$0xff]
        %v624 = vld [vmem:[#allocation10 + $0x108] sm:$0xff]
        %v625 = vld [vmem:[#allocation10 + $0x110] sm:$0xff]
        %v626 = vld [vmem:[#allocation10 + $0x118] sm:$0xff]
        %v627 = vld [vmem:[#allocation10 + $0x120] sm:$0xff]
        %v628 = vld [vmem:[#allocation10 + $0x128] sm:$0xff]
        %v629 = vld [vmem:[#allocation10 + $0x130] sm:$0xff]
        %v630 = vld [vmem:[#allocation10 + $0x138] sm:$0xff]
        %v631 = vld [vmem:[#allocation10 + $0x140] sm:$0xff]
        %v632 = vld [vmem:[#allocation10 + $0x148] sm:$0xff]
        %v633 = vld [vmem:[#allocation10 + $0x150] sm:$0xff]
        %v634 = vld [vmem:[#allocation10 + $0x158] sm:$0xff]
        %v635 = vld [vmem:[#allocation10 + $0x160] sm:$0xff]
        %v636 = vld [vmem:[#allocation10 + $0x168] sm:$0xff]
        %v637 = vld [vmem:[#allocation10 + $0x170] sm:$0xff]
        %v638 = vld [vmem:[#allocation10 + $0x178] sm:$0xff]
        %v639 = vld [vmem:[#allocation10 + $0x180] sm:$0xff]
        %v640 = vld [vmem:[#allocation10 + $0x188] sm:$0xff]
        %v641 = vld [vmem:[#allocation10 + $0x190] sm:$0xff]
        %v642 = vld [vmem:[#allocation10 + $0x198] sm:$0xff]
        %v643 = vld [vmem:[#allocation10 + $0x1a0] sm:$0xff]
        %v644 = vld [vmem:[#allocation10 + $0x1a8] sm:$0xff]
        %v645 = vld [vmem:[#allocation10 + $0x1b0] sm:$0xff]
        %v646 = vld [vmem:[#allocation10 + $0x1b8] sm:$0xff]
        %v647 = vld [vmem:[#allocation10 + $0x1c0] sm:$0xff]
        %v648 = vld [vmem:[#allocation10 + $0x1c8] sm:$0xff]
        %v649 = vld [vmem:[#allocation10 + $0x1d0] sm:$0xff]
        %v650 = vld [vmem:[#allocation10 + $0x1d8] sm:$0xff]
        %v651 = vld [vmem:[#allocation10 + $0x1e0] sm:$0xff]
        %v652 = vld [vmem:[#allocation10 + $0x1e8] sm:$0xff]
        %v653 = vld [vmem:[#allocation10 + $0x1f0] sm:$0xff]
        %v654 = vld [vmem:[#allocation10 + $0x1f8] sm:$0xff]
        %v655 = vld [vmem:[#allocation3] sm:$0xf]
        %v656 = vld [vmem:[#allocation4] sm:$0xf]
        %v657 = vld [vmem:[#allocation2] sm:$0xff]
        %v658 = vld [vmem:[#allocation2 + $0x8] sm:$0xff]
        %659 = vmatprep.subr.mxu0 %v592
        %660 = vmatpush1.msra.mxu0 %v591
        %661 = vmatprep.subr.mxu0 %v596
        %662 = vmatpush1.msra.mxu0 %v595
        %663 = vmatprep.subr.mxu0 %v600
        %664 = vmatpush1.msra.mxu0 %v599
        %665 = vmatprep.subr.mxu0 %v604
        %666 = vmatpush1.msra.mxu0 %v603
        %667 = vmatprep.subr.mxu0 %v608
        %668 = vmatpush1.msra.mxu0 %v607
        %669 = vmatprep.subr.mxu0 %v612
        %670 = vmatpush1.msra.mxu0 %v611
        %671 = vmatprep.subr.mxu0 %v616
        %672 = vmatpush1.msra.mxu0 %v615
        %673 = vmatprep.subr.mxu0 %v620
        %674 = vmatpush1.msra.mxu0 %v619
        %675 = vmatprep.subr.mxu0 %v624
        %676 = vmatpush1.msra.mxu0 %v623
        %677 = vmatprep.subr.mxu0 %v628
        %678 = vmatpush1.msra.mxu0 %v627
        %679 = vmatprep.subr.mxu0 %v632
        %680 = vmatpush1.msra.mxu0 %v631
        %681 = vmatprep.subr.mxu0 %v636
        %682 = vmatpush1.msra.mxu0 %v635
        %683 = vmatprep.subr.mxu0 %v640
        %684 = vmatpush1.msra.mxu0 %v639
        %685 = vmatprep.subr.mxu0 %v644
        %686 = vmatpush1.msra.mxu0 %v643
        %687 = vmatprep.subr.mxu0 %v648
        %688 = vmatpush1.msra.mxu0 %v647
        %689 = vmatprep.subr.mxu0 %v652
        %690 = vmatpush1.msra.mxu0 %v651
        %691 = vmatprep.subr.mxu0 0.0
        %692 = vmatpush1.msra.mxu0 0.0
        %693 = vmatprep.subr.mxu0 0.0
        %694 = vmatpush1.msra.mxu0 0.0
        %695 = vmatprep.subr.mxu0 0.0
        %696 = vmatpush1.msra.mxu0 0.0
        %697 = vmatprep.subr.mxu0 0.0
        %698 = vmatpush1.msra.mxu0 0.0
        %699 = vmatprep.subr.mxu0 0.0
        %700 = vmatpush1.msra.mxu0 0.0
        %701 = vmatprep.subr.mxu0 0.0
        %702 = vmatpush1.msra.mxu0 0.0
        %703 = vmatprep.subr.mxu0 0.0
        %704 = vmatpush1.msra.mxu0 0.0
        %705 = vmatprep.subr.mxu0 0.0
        %706 = vmatpush1.msra.mxu0 0.0
        %707 = vmatprep.subr.mxu0 0.0
        %708 = vmatpush1.msra.mxu0 0.0
        %709 = vmatprep.subr.mxu0 0.0
        %710 = vmatpush1.msra.mxu0 0.0
        %711 = vmatprep.subr.mxu0 0.0
        %712 = vmatpush1.msra.mxu0 0.0
        %713 = vmatprep.subr.mxu0 0.0
        %714 = vmatpush1.msra.mxu0 0.0
        %715 = vmatprep.subr.mxu0 0.0
        %716 = vmatpush1.msra.mxu0 0.0
        %717 = vmatprep.subr.mxu0 0.0
        %718 = vmatpush1.msra.mxu0 0.0
        %719 = vmatprep.subr.mxu0 0.0
        %720 = vmatpush1.msra.mxu0 0.0
        %721 = vmatprep.subr.mxu0 0.0
        %722 = vmatpush1.msra.mxu0 0.0
        %723 = vmatprep.mubr.f32.mxu0 0.0
        %724 = vmatmul.mubr.f32.gmra.mrb[0].mxu0 %v655
        %v725 = vpop.f32.mrb[0].mxu0
        %v726 = vadd.f32 0.0, %v725
        %v727 = vpop.f32.mrb[0].mxu0
        %v728 = vadd.f32 0.0, %v727
        %729 = vdwg.mxu0
        %730 = vmatprep.subr.mxu0 %v594
        %731 = vmatpush1.msra.mxu0 %v593
        %732 = vmatprep.subr.mxu0 %v598
        %733 = vmatpush1.msra.mxu0 %v597
        %734 = vmatprep.subr.mxu0 %v602
        %735 = vmatpush1.msra.mxu0 %v601
        %736 = vmatprep.subr.mxu0 %v606
        %737 = vmatpush1.msra.mxu0 %v605
        %738 = vmatprep.subr.mxu0 %v610
        %739 = vmatpush1.msra.mxu0 %v609
        %740 = vmatprep.subr.mxu0 %v614
        %741 = vmatpush1.msra.mxu0 %v613
        %742 = vmatprep.subr.mxu0 %v618
        %743 = vmatpush1.msra.mxu0 %v617
        %744 = vmatprep.subr.mxu0 %v622
        %745 = vmatpush1.msra.mxu0 %v621
        %746 = vmatprep.subr.mxu0 %v626
        %747 = vmatpush1.msra.mxu0 %v625
        %748 = vmatprep.subr.mxu0 %v630
        %749 = vmatpush1.msra.mxu0 %v629
        %750 = vmatprep.subr.mxu0 %v634
        %751 = vmatpush1.msra.mxu0 %v633
        %752 = vmatprep.subr.mxu0 %v638
        %753 = vmatpush1.msra.mxu0 %v637
        %754 = vmatprep.subr.mxu0 %v642
        %755 = vmatpush1.msra.mxu0 %v641
        %756 = vmatprep.subr.mxu0 %v646
        %757 = vmatpush1.msra.mxu0 %v645
        %758 = vmatprep.subr.mxu0 %v650
        %759 = vmatpush1.msra.mxu0 %v649
        %760 = vmatprep.subr.mxu0 %v654
        %761 = vmatpush1.msra.mxu0 %v653
        %762 = vmatprep.subr.mxu0 0.0
        %763 = vmatpush1.msra.mxu0 0.0
        %764 = vmatprep.subr.mxu0 0.0
        %765 = vmatpush1.msra.mxu0 0.0
        %766 = vmatprep.subr.mxu0 0.0
        %767 = vmatpush1.msra.mxu0 0.0
        %768 = vmatprep.subr.mxu0 0.0
        %769 = vmatpush1.msra.mxu0 0.0
        %770 = vmatprep.subr.mxu0 0.0
        %771 = vmatpush1.msra.mxu0 0.0
        %772 = vmatprep.subr.mxu0 0.0
        %773 = vmatpush1.msra.mxu0 0.0
        %774 = vmatprep.subr.mxu0 0.0
        %775 = vmatpush1.msra.mxu0 0.0
        %776 = vmatprep.subr.mxu0 0.0
        %777 = vmatpush1.msra.mxu0 0.0
        %778 = vmatprep.subr.mxu0 0.0
        %779 = vmatpush1.msra.mxu0 0.0
        %780 = vmatprep.subr.mxu0 0.0
        %781 = vmatpush1.msra.mxu0 0.0
        %782 = vmatprep.subr.mxu0 0.0
        %783 = vmatpush1.msra.mxu0 0.0
        %784 = vmatprep.subr.mxu0 0.0
        %785 = vmatpush1.msra.mxu0 0.0
        %786 = vmatprep.subr.mxu0 0.0
        %787 = vmatpush1.msra.mxu0 0.0
        %788 = vmatprep.subr.mxu0 0.0
        %789 = vmatpush1.msra.mxu0 0.0
        %790 = vmatprep.subr.mxu0 0.0
        %791 = vmatpush1.msra.mxu0 0.0
        %792 = vmatprep.subr.mxu0 0.0
        %793 = vmatpush1.msra.mxu0 0.0
        %794 = vmatprep.mubr.f32.mxu0 0.0
        %795 = vmatmul.mubr.f32.gmra.mrb[0].mxu0 %v655
        %v796 = vpop.f32.mrb[0].mxu0
        %v797 = vadd.f32 0.0, %v796
        %v798 = vpop.f32.mrb[0].mxu0
        %v799 = vadd.f32 0.0, %v798
        %800 = vdwg.mxu0
        %v805 = vcombine.low %v726, %v728
        %v806 = vcombine.low %v797, %v799
        %v809 = vadd.f32 %v657, %v805
        %v810 = vadd.f32 %v658, %v806
        %v811 = vxor.u32 %v809, 2147483648
        %v812 = vmul.f32 %v811, 1.442695
        %v813 = vpow.pop %v812
        %v814 = vadd.f32 %v813, 1.0
        %v815 = vrcp.pop %v814
        %v816 = vmul.f32 1.0, %v815
        %v818 = vrot.slane %v809, 4
        %v820 = vxor.u32 %v818, 2147483648
        %v821 = vmul.f32 %v820, 1.442695
        %v822 = vpow.pop %v821
        %v823 = vadd.f32 %v822, 1.0
        %v824 = vrcp.pop %v823
        %v825 = vmul.f32 1.0, %v824
        %v826 = vtanh.pop %v810
        %v828 = vrot.slane %v810, 4
        %v830 = vxor.u32 %v828, 2147483648
        %v831 = vmul.f32 %v830, 1.442695
        %v832 = vpow.pop %v831
        %v833 = vadd.f32 %v832, 1.0
        %v834 = vrcp.pop %v833
        %v835 = vmul.f32 1.0, %v834
        %v836 = vmul.f32 %v825, %v656
        %v837 = vmul.f32 %v816, %v826
        %v838 = vadd.f32 %v836, %v837
        %v839 = vtanh.pop %v838
        %v840 = vmul.f32 %v835, %v839
        %841 = vst [vmem:[%s341] sm:$0xf] %v840
        %s842 = scalar_lea.vmem [#allocation2], 16
        %v843 = vld [vmem:[%s842] sm:$0xff]
        %v844 = vld [vmem:[%s842 + $0x8] sm:$0xff]
        %845 = vmatprep.subr.mxu0 %v592
        %846 = vmatpush1.msra.mxu0 %v591
        %847 = vmatprep.subr.mxu0 %v596
        %848 = vmatpush1.msra.mxu0 %v595
        %849 = vmatprep.subr.mxu0 %v600
        %850 = vmatpush1.msra.mxu0 %v599
        %851 = vmatprep.subr.mxu0 %v604
        %852 = vmatpush1.msra.mxu0 %v603
        %853 = vmatprep.subr.mxu0 %v608
        %854 = vmatpush1.msra.mxu0 %v607
        %855 = vmatprep.subr.mxu0 %v612
        %856 = vmatpush1.msra.mxu0 %v611
        %857 = vmatprep.subr.mxu0 %v616
        %858 = vmatpush1.msra.mxu0 %v615
        %859 = vmatprep.subr.mxu0 %v620
        %860 = vmatpush1.msra.mxu0 %v619
        %861 = vmatprep.subr.mxu0 %v624
        %862 = vmatpush1.msra.mxu0 %v623
        %863 = vmatprep.subr.mxu0 %v628
        %864 = vmatpush1.msra.mxu0 %v627
        %865 = vmatprep.subr.mxu0 %v632
        %866 = vmatpush1.msra.mxu0 %v631
        %867 = vmatprep.subr.mxu0 %v636
        %868 = vmatpush1.msra.mxu0 %v635
        %869 = vmatprep.subr.mxu0 %v640
        %870 = vmatpush1.msra.mxu0 %v639
        %871 = vmatprep.subr.mxu0 %v644
        %872 = vmatpush1.msra.mxu0 %v643
        %873 = vmatprep.subr.mxu0 %v648
        %874 = vmatpush1.msra.mxu0 %v647
        %875 = vmatprep.subr.mxu0 %v652
        %876 = vmatpush1.msra.mxu0 %v651
        %877 = vmatprep.subr.mxu0 0.0
        %878 = vmatpush1.msra.mxu0 0.0
        %879 = vmatprep.subr.mxu0 0.0
        %880 = vmatpush1.msra.mxu0 0.0
        %881 = vmatprep.subr.mxu0 0.0
        %882 = vmatpush1.msra.mxu0 0.0
        %883 = vmatprep.subr.mxu0 0.0
        %884 = vmatpush1.msra.mxu0 0.0
        %885 = vmatprep.subr.mxu0 0.0
        %886 = vmatpush1.msra.mxu0 0.0
        %887 = vmatprep.subr.mxu0 0.0
        %888 = vmatpush1.msra.mxu0 0.0
        %889 = vmatprep.subr.mxu0 0.0
        %890 = vmatpush1.msra.mxu0 0.0
        %891 = vmatprep.subr.mxu0 0.0
        %892 = vmatpush1.msra.mxu0 0.0
        %893 = vmatprep.subr.mxu0 0.0
        %894 = vmatpush1.msra.mxu0 0.0
        %895 = vmatprep.subr.mxu0 0.0
        %896 = vmatpush1.msra.mxu0 0.0
        %897 = vmatprep.subr.mxu0 0.0
        %898 = vmatpush1.msra.mxu0 0.0
        %899 = vmatprep.subr.mxu0 0.0
        %900 = vmatpush1.msra.mxu0 0.0
        %901 = vmatprep.subr.mxu0 0.0
        %902 = vmatpush1.msra.mxu0 0.0
        %903 = vmatprep.subr.mxu0 0.0
        %904 = vmatpush1.msra.mxu0 0.0
        %905 = vmatprep.subr.mxu0 0.0
        %906 = vmatpush1.msra.mxu0 0.0
        %907 = vmatprep.subr.mxu0 0.0
        %908 = vmatpush1.msra.mxu0 0.0
        %909 = vmatprep.mubr.f32.mxu0 0.0
        %910 = vmatmul.mubr.f32.gmra.mrb[0].mxu0 %v840
        %v911 = vpop.f32.mrb[0].mxu0
        %v912 = vadd.f32 0.0, %v911
        %v913 = vpop.f32.mrb[0].mxu0
        %v914 = vadd.f32 0.0, %v913
        %915 = vdwg.mxu0
        %916 = vmatprep.subr.mxu0 %v594
        %917 = vmatpush1.msra.mxu0 %v593
        %918 = vmatprep.subr.mxu0 %v598
        %919 = vmatpush1.msra.mxu0 %v597
        %920 = vmatprep.subr.mxu0 %v602
        %921 = vmatpush1.msra.mxu0 %v601
        %922 = vmatprep.subr.mxu0 %v606
        %923 = vmatpush1.msra.mxu0 %v605
        %924 = vmatprep.subr.mxu0 %v610
        %925 = vmatpush1.msra.mxu0 %v609
        %926 = vmatprep.subr.mxu0 %v614
        %927 = vmatpush1.msra.mxu0 %v613
        %928 = vmatprep.subr.mxu0 %v618
        %929 = vmatpush1.msra.mxu0 %v617
        %930 = vmatprep.subr.mxu0 %v622
        %931 = vmatpush1.msra.mxu0 %v621
        %932 = vmatprep.subr.mxu0 %v626
        %933 = vmatpush1.msra.mxu0 %v625
        %934 = vmatprep.subr.mxu0 %v630
        %935 = vmatpush1.msra.mxu0 %v629
        %936 = vmatprep.subr.mxu0 %v634
        %937 = vmatpush1.msra.mxu0 %v633
        %938 = vmatprep.subr.mxu0 %v638
        %939 = vmatpush1.msra.mxu0 %v637
        %940 = vmatprep.subr.mxu0 %v642
        %941 = vmatpush1.msra.mxu0 %v641
        %942 = vmatprep.subr.mxu0 %v646
        %943 = vmatpush1.msra.mxu0 %v645
        %944 = vmatprep.subr.mxu0 %v650
        %945 = vmatpush1.msra.mxu0 %v649
        %946 = vmatprep.subr.mxu0 %v654
        %947 = vmatpush1.msra.mxu0 %v653
        %948 = vmatprep.subr.mxu0 0.0
        %949 = vmatpush1.msra.mxu0 0.0
        %950 = vmatprep.subr.mxu0 0.0
        %951 = vmatpush1.msra.mxu0 0.0
        %952 = vmatprep.subr.mxu0 0.0
        %953 = vmatpush1.msra.mxu0 0.0
        %954 = vmatprep.subr.mxu0 0.0
        %955 = vmatpush1.msra.mxu0 0.0
        %956 = vmatprep.subr.mxu0 0.0
        %957 = vmatpush1.msra.mxu0 0.0
        %958 = vmatprep.subr.mxu0 0.0
        %959 = vmatpush1.msra.mxu0 0.0
        %960 = vmatprep.subr.mxu0 0.0
        %961 = vmatpush1.msra.mxu0 0.0
        %962 = vmatprep.subr.mxu0 0.0
        %963 = vmatpush1.msra.mxu0 0.0
        %964 = vmatprep.subr.mxu0 0.0
        %965 = vmatpush1.msra.mxu0 0.0
        %966 = vmatprep.subr.mxu0 0.0
        %967 = vmatpush1.msra.mxu0 0.0
        %968 = vmatprep.subr.mxu0 0.0
        %969 = vmatpush1.msra.mxu0 0.0
        %970 = vmatprep.subr.mxu0 0.0
        %971 = vmatpush1.msra.mxu0 0.0
        %972 = vmatprep.subr.mxu0 0.0
        %973 = vmatpush1.msra.mxu0 0.0
        %974 = vmatprep.subr.mxu0 0.0
        %975 = vmatpush1.msra.mxu0 0.0
        %976 = vmatprep.subr.mxu0 0.0
        %977 = vmatpush1.msra.mxu0 0.0
        %978 = vmatprep.subr.mxu0 0.0
        %979 = vmatpush1.msra.mxu0 0.0
        %980 = vmatprep.mubr.f32.mxu0 0.0
        %981 = vmatmul.mubr.f32.gmra.mrb[0].mxu0 %v840
        %v982 = vpop.f32.mrb[0].mxu0
        %v983 = vadd.f32 0.0, %v982
        %v984 = vpop.f32.mrb[0].mxu0
        %v985 = vadd.f32 0.0, %v984
        %986 = vdwg.mxu0
        %v991 = vcombine.low %v912, %v914
        %v992 = vcombine.low %v983, %v985
        %v995 = vadd.f32 %v843, %v991
        %v996 = vadd.f32 %v844, %v992
        %v997 = vxor.u32 %v995, 2147483648
        %v998 = vmul.f32 %v997, 1.442695
        %v999 = vpow.pop %v998
        %v1000 = vadd.f32 %v999, 1.0
        %v1001 = vrcp.pop %v1000
        %v1002 = vmul.f32 1.0, %v1001
        %v1004 = vrot.slane %v995, 4
        %v1006 = vxor.u32 %v1004, 2147483648
        %v1007 = vmul.f32 %v1006, 1.442695
        %v1008 = vpow.pop %v1007
        %v1009 = vadd.f32 %v1008, 1.0
        %v1010 = vrcp.pop %v1009
        %v1011 = vmul.f32 1.0, %v1010
        %v1012 = vtanh.pop %v996
        %v1014 = vrot.slane %v996, 4
        %v1016 = vxor.u32 %v1014, 2147483648
        %v1017 = vmul.f32 %v1016, 1.442695
        %v1018 = vpow.pop %v1017
        %v1019 = vadd.f32 %v1018, 1.0
        %v1020 = vrcp.pop %v1019
        %v1021 = vmul.f32 1.0, %v1020
        %v1022 = vmul.f32 %v1011, %v838
        %v1023 = vmul.f32 %v1002, %v1012
        %v1024 = vadd.f32 %v1022, %v1023
        %v1025 = vtanh.pop %v1024
        %v1026 = vmul.f32 %v1021, %v1025
        %s1027 = scalar_lea.vmem %s341, 4 [#allocation11]
        %1028 = vst [vmem:[%s1027] sm:$0xf] %v1026
        %s1029 = scalar_lea.vmem [#allocation2], 32
        %v1030 = vld [vmem:[%s1029] sm:$0xff]
        %v1031 = vld [vmem:[%s1029 + $0x8] sm:$0xff]
        %1032 = vmatprep.subr.mxu0 %v592
        %1033 = vmatpush1.msra.mxu0 %v591
        %1034 = vmatprep.subr.mxu0 %v596
        %1035 = vmatpush1.msra.mxu0 %v595
        %1036 = vmatprep.subr.mxu0 %v600
        %1037 = vmatpush1.msra.mxu0 %v599
        %1038 = vmatprep.subr.mxu0 %v604
        %1039 = vmatpush1.msra.mxu0 %v603
        %1040 = vmatprep.subr.mxu0 %v608
        %1041 = vmatpush1.msra.mxu0 %v607
        %1042 = vmatprep.subr.mxu0 %v612
        %1043 = vmatpush1.msra.mxu0 %v611
        %1044 = vmatprep.subr.mxu0 %v616
        %1045 = vmatpush1.msra.mxu0 %v615
        %1046 = vmatprep.subr.mxu0 %v620
        %1047 = vmatpush1.msra.mxu0 %v619
        %1048 = vmatprep.subr.mxu0 %v624
        %1049 = vmatpush1.msra.mxu0 %v623
        %1050 = vmatprep.subr.mxu0 %v628
        %1051 = vmatpush1.msra.mxu0 %v627
        %1052 = vmatprep.subr.mxu0 %v632
        %1053 = vmatpush1.msra.mxu0 %v631
        %1054 = vmatprep.subr.mxu0 %v636
        %1055 = vmatpush1.msra.mxu0 %v635
        %1056 = vmatprep.subr.mxu0 %v640
        %1057 = vmatpush1.msra.mxu0 %v639
        %1058 = vmatprep.subr.mxu0 %v644
        %1059 = vmatpush1.msra.mxu0 %v643
        %1060 = vmatprep.subr.mxu0 %v648
        %1061 = vmatpush1.msra.mxu0 %v647
        %1062 = vmatprep.subr.mxu0 %v652
        %1063 = vmatpush1.msra.mxu0 %v651
        %1064 = vmatprep.subr.mxu0 0.0
        %1065 = vmatpush1.msra.mxu0 0.0
        %1066 = vmatprep.subr.mxu0 0.0
        %1067 = vmatpush1.msra.mxu0 0.0
        %1068 = vmatprep.subr.mxu0 0.0
        %1069 = vmatpush1.msra.mxu0 0.0
        %1070 = vmatprep.subr.mxu0 0.0
        %1071 = vmatpush1.msra.mxu0 0.0
        %1072 = vmatprep.subr.mxu0 0.0
        %1073 = vmatpush1.msra.mxu0 0.0
        %1074 = vmatprep.subr.mxu0 0.0
        %1075 = vmatpush1.msra.mxu0 0.0
        %1076 = vmatprep.subr.mxu0 0.0
        %1077 = vmatpush1.msra.mxu0 0.0
        %1078 = vmatprep.subr.mxu0 0.0
        %1079 = vmatpush1.msra.mxu0 0.0
        %1080 = vmatprep.subr.mxu0 0.0
        %1081 = vmatpush1.msra.mxu0 0.0
        %1082 = vmatprep.subr.mxu0 0.0
        %1083 = vmatpush1.msra.mxu0 0.0
        %1084 = vmatprep.subr.mxu0 0.0
        %1085 = vmatpush1.msra.mxu0 0.0
        %1086 = vmatprep.subr.mxu0 0.0
        %1087 = vmatpush1.msra.mxu0 0.0
        %1088 = vmatprep.subr.mxu0 0.0
        %1089 = vmatpush1.msra.mxu0 0.0
        %1090 = vmatprep.subr.mxu0 0.0
        %1091 = vmatpush1.msra.mxu0 0.0
        %1092 = vmatprep.subr.mxu0 0.0
        %1093 = vmatpush1.msra.mxu0 0.0
        %1094 = vmatprep.subr.mxu0 0.0
        %1095 = vmatpush1.msra.mxu0 0.0
        %1096 = vmatprep.mubr.f32.mxu0 0.0
        %1097 = vmatmul.mubr.f32.gmra.mrb[0].mxu0 %v1026
        %v1098 = vpop.f32.mrb[0].mxu0
        %v1099 = vadd.f32 0.0, %v1098
        %v1100 = vpop.f32.mrb[0].mxu0
        %v1101 = vadd.f32 0.0, %v1100
        %1102 = vdwg.mxu0
        %1103 = vmatprep.subr.mxu0 %v594
        %1104 = vmatpush1.msra.mxu0 %v593
        %1105 = vmatprep.subr.mxu0 %v598
        %1106 = vmatpush1.msra.mxu0 %v597
        %1107 = vmatprep.subr.mxu0 %v602
        %1108 = vmatpush1.msra.mxu0 %v601
        %1109 = vmatprep.subr.mxu0 %v606
        %1110 = vmatpush1.msra.mxu0 %v605
        %1111 = vmatprep.subr.mxu0 %v610
        %1112 = vmatpush1.msra.mxu0 %v609
        %1113 = vmatprep.subr.mxu0 %v614
        %1114 = vmatpush1.msra.mxu0 %v613
        %1115 = vmatprep.subr.mxu0 %v618
        %1116 = vmatpush1.msra.mxu0 %v617
        %1117 = vmatprep.subr.mxu0 %v622
        %1118 = vmatpush1.msra.mxu0 %v621
        %1119 = vmatprep.subr.mxu0 %v626
        %1120 = vmatpush1.msra.mxu0 %v625
        %1121 = vmatprep.subr.mxu0 %v630
        %1122 = vmatpush1.msra.mxu0 %v629
        %1123 = vmatprep.subr.mxu0 %v634
        %1124 = vmatpush1.msra.mxu0 %v633
        %1125 = vmatprep.subr.mxu0 %v638
        %1126 = vmatpush1.msra.mxu0 %v637
        %1127 = vmatprep.subr.mxu0 %v642
        %1128 = vmatpush1.msra.mxu0 %v641
        %1129 = vmatprep.subr.mxu0 %v646
        %1130 = vmatpush1.msra.mxu0 %v645
        %1131 = vmatprep.subr.mxu0 %v650
        %1132 = vmatpush1.msra.mxu0 %v649
        %1133 = vmatprep.subr.mxu0 %v654
        %1134 = vmatpush1.msra.mxu0 %v653
        %1135 = vmatprep.subr.mxu0 0.0
        %1136 = vmatpush1.msra.mxu0 0.0
        %1137 = vmatprep.subr.mxu0 0.0
        %1138 = vmatpush1.msra.mxu0 0.0
        %1139 = vmatprep.subr.mxu0 0.0
        %1140 = vmatpush1.msra.mxu0 0.0
        %1141 = vmatprep.subr.mxu0 0.0
        %1142 = vmatpush1.msra.mxu0 0.0
        %1143 = vmatprep.subr.mxu0 0.0
        %1144 = vmatpush1.msra.mxu0 0.0
        %1145 = vmatprep.subr.mxu0 0.0
        %1146 = vmatpush1.msra.mxu0 0.0
        %1147 = vmatprep.subr.mxu0 0.0
        %1148 = vmatpush1.msra.mxu0 0.0
        %1149 = vmatprep.subr.mxu0 0.0
        %1150 = vmatpush1.msra.mxu0 0.0
        %1151 = vmatprep.subr.mxu0 0.0
        %1152 = vmatpush1.msra.mxu0 0.0
        %1153 = vmatprep.subr.mxu0 0.0
        %1154 = vmatpush1.msra.mxu0 0.0
        %1155 = vmatprep.subr.mxu0 0.0
        %1156 = vmatpush1.msra.mxu0 0.0
        %1157 = vmatprep.subr.mxu0 0.0
        %1158 = vmatpush1.msra.mxu0 0.0
        %1159 = vmatprep.subr.mxu0 0.0
        %1160 = vmatpush1.msra.mxu0 0.0
        %1161 = vmatprep.subr.mxu0 0.0
        %1162 = vmatpush1.msra.mxu0 0.0
        %1163 = vmatprep.subr.mxu0 0.0
        %1164 = vmatpush1.msra.mxu0 0.0
        %1165 = vmatprep.subr.mxu0 0.0
        %1166 = vmatpush1.msra.mxu0 0.0
        %1167 = vmatprep.mubr.f32.mxu0 0.0
        %1168 = vmatmul.mubr.f32.gmra.mrb[0].mxu0 %v1026
        %v1169 = vpop.f32.mrb[0].mxu0
        %v1170 = vadd.f32 0.0, %v1169
        %v1171 = vpop.f32.mrb[0].mxu0
        %v1172 = vadd.f32 0.0, %v1171
        %1173 = vdwg.mxu0
        %v1178 = vcombine.low %v1099, %v1101
        %v1179 = vcombine.low %v1170, %v1172
        %v1182 = vadd.f32 %v1030, %v1178
        %v1183 = vadd.f32 %v1031, %v1179
        %v1184 = vxor.u32 %v1182, 2147483648
        %v1185 = vmul.f32 %v1184, 1.442695
        %v1186 = vpow.pop %v1185
        %v1187 = vadd.f32 %v1186, 1.0
        %v1188 = vrcp.pop %v1187
        %v1189 = vmul.f32 1.0, %v1188
        %v1191 = vrot.slane %v1182, 4
        %v1193 = vxor.u32 %v1191, 2147483648
        %v1194 = vmul.f32 %v1193, 1.442695
        %v1195 = vpow.pop %v1194
        %v1196 = vadd.f32 %v1195, 1.0
        %v1197 = vrcp.pop %v1196
        %v1198 = vmul.f32 1.0, %v1197
        %v1199 = vtanh.pop %v1183
        %v1201 = vrot.slane %v1183, 4
        %v1203 = vxor.u32 %v1201, 2147483648
        %v1204 = vmul.f32 %v1203, 1.442695
        %v1205 = vpow.pop %v1204
        %v1206 = vadd.f32 %v1205, 1.0
        %v1207 = vrcp.pop %v1206
        %v1208 = vmul.f32 1.0, %v1207
        %v1209 = vmul.f32 %v1198, %v1024
        %v1210 = vmul.f32 %v1189, %v1199
        %v1211 = vadd.f32 %v1209, %v1210
        %v1212 = vtanh.pop %v1211
        %v1213 = vmul.f32 %v1208, %v1212
        %s1214 = scalar_lea.vmem %s341, 8 [#allocation11]
        %1215 = vst [vmem:[%s1214] sm:$0xf] %v1213
        %s1216 = scalar_lea.vmem [#allocation2], 48
        %v1217 = vld [vmem:[%s1216] sm:$0xff]
        %v1218 = vld [vmem:[%s1216 + $0x8] sm:$0xff]
        %1219 = vmatprep.subr.mxu0 %v592
        %1220 = vmatpush1.msra.mxu0 %v591
        %1221 = vmatprep.subr.mxu0 %v596
        %1222 = vmatpush1.msra.mxu0 %v595
        %1223 = vmatprep.subr.mxu0 %v600
        %1224 = vmatpush1.msra.mxu0 %v599
        %1225 = vmatprep.subr.mxu0 %v604
        %1226 = vmatpush1.msra.mxu0 %v603
        %1227 = vmatprep.subr.mxu0 %v608
        %1228 = vmatpush1.msra.mxu0 %v607
        %1229 = vmatprep.subr.mxu0 %v612
        %1230 = vmatpush1.msra.mxu0 %v611
        %1231 = vmatprep.subr.mxu0 %v616
        %1232 = vmatpush1.msra.mxu0 %v615
        %1233 = vmatprep.subr.mxu0 %v620
        %1234 = vmatpush1.msra.mxu0 %v619
        %1235 = vmatprep.subr.mxu0 %v624
        %1236 = vmatpush1.msra.mxu0 %v623
        %1237 = vmatprep.subr.mxu0 %v628
        %1238 = vmatpush1.msra.mxu0 %v627
        %1239 = vmatprep.subr.mxu0 %v632
        %1240 = vmatpush1.msra.mxu0 %v631
        %1241 = vmatprep.subr.mxu0 %v636
        %1242 = vmatpush1.msra.mxu0 %v635
        %1243 = vmatprep.subr.mxu0 %v640
        %1244 = vmatpush1.msra.mxu0 %v639
        %1245 = vmatprep.subr.mxu0 %v644
        %1246 = vmatpush1.msra.mxu0 %v643
        %1247 = vmatprep.subr.mxu0 %v648
        %1248 = vmatpush1.msra.mxu0 %v647
        %1249 = vmatprep.subr.mxu0 %v652
        %1250 = vmatpush1.msra.mxu0 %v651
        %1251 = vmatprep.subr.mxu0 0.0
        %1252 = vmatpush1.msra.mxu0 0.0
        %1253 = vmatprep.subr.mxu0 0.0
        %1254 = vmatpush1.msra.mxu0 0.0
        %1255 = vmatprep.subr.mxu0 0.0
        %1256 = vmatpush1.msra.mxu0 0.0
        %1257 = vmatprep.subr.mxu0 0.0
        %1258 = vmatpush1.msra.mxu0 0.0
        %1259 = vmatprep.subr.mxu0 0.0
        %1260 = vmatpush1.msra.mxu0 0.0
        %1261 = vmatprep.subr.mxu0 0.0
        %1262 = vmatpush1.msra.mxu0 0.0
        %1263 = vmatprep.subr.mxu0 0.0
        %1264 = vmatpush1.msra.mxu0 0.0
        %1265 = vmatprep.subr.mxu0 0.0
        %1266 = vmatpush1.msra.mxu0 0.0
        %1267 = vmatprep.subr.mxu0 0.0
        %1268 = vmatpush1.msra.mxu0 0.0
        %1269 = vmatprep.subr.mxu0 0.0
        %1270 = vmatpush1.msra.mxu0 0.0
        %1271 = vmatprep.subr.mxu0 0.0
        %1272 = vmatpush1.msra.mxu0 0.0
        %1273 = vmatprep.subr.mxu0 0.0
        %1274 = vmatpush1.msra.mxu0 0.0
        %1275 = vmatprep.subr.mxu0 0.0
        %1276 = vmatpush1.msra.mxu0 0.0
        %1277 = vmatprep.subr.mxu0 0.0
        %1278 = vmatpush1.msra.mxu0 0.0
        %1279 = vmatprep.subr.mxu0 0.0
        %1280 = vmatpush1.msra.mxu0 0.0
        %1281 = vmatprep.subr.mxu0 0.0
        %1282 = vmatpush1.msra.mxu0 0.0
        %1283 = vmatprep.mubr.f32.mxu0 0.0
        %1284 = vmatmul.mubr.f32.gmra.mrb[0].mxu0 %v1213
        %v1285 = vpop.f32.mrb[0].mxu0
        %v1286 = vadd.f32 0.0, %v1285
        %v1287 = vpop.f32.mrb[0].mxu0
        %v1288 = vadd.f32 0.0, %v1287
        %1289 = vdwg.mxu0
        %1290 = vmatprep.subr.mxu0 %v594
        %1291 = vmatpush1.msra.mxu0 %v593
        %1292 = vmatprep.subr.mxu0 %v598
        %1293 = vmatpush1.msra.mxu0 %v597
        %1294 = vmatprep.subr.mxu0 %v602
        %1295 = vmatpush1.msra.mxu0 %v601
        %1296 = vmatprep.subr.mxu0 %v606
        %1297 = vmatpush1.msra.mxu0 %v605
        %1298 = vmatprep.subr.mxu0 %v610
        %1299 = vmatpush1.msra.mxu0 %v609
        %1300 = vmatprep.subr.mxu0 %v614
        %1301 = vmatpush1.msra.mxu0 %v613
        %1302 = vmatprep.subr.mxu0 %v618
        %1303 = vmatpush1.msra.mxu0 %v617
        %1304 = vmatprep.subr.mxu0 %v622
        %1305 = vmatpush1.msra.mxu0 %v621
        %1306 = vmatprep.subr.mxu0 %v626
        %1307 = vmatpush1.msra.mxu0 %v625
        %1308 = vmatprep.subr.mxu0 %v630
        %1309 = vmatpush1.msra.mxu0 %v629
        %1310 = vmatprep.subr.mxu0 %v634
        %1311 = vmatpush1.msra.mxu0 %v633
        %1312 = vmatprep.subr.mxu0 %v638
        %1313 = vmatpush1.msra.mxu0 %v637
        %1314 = vmatprep.subr.mxu0 %v642
        %1315 = vmatpush1.msra.mxu0 %v641
        %1316 = vmatprep.subr.mxu0 %v646
        %1317 = vmatpush1.msra.mxu0 %v645
        %1318 = vmatprep.subr.mxu0 %v650
        %1319 = vmatpush1.msra.mxu0 %v649
        %1320 = vmatprep.subr.mxu0 %v654
        %1321 = vmatpush1.msra.mxu0 %v653
        %1322 = vmatprep.subr.mxu0 0.0
        %1323 = vmatpush1.msra.mxu0 0.0
        %1324 = vmatprep.subr.mxu0 0.0
        %1325 = vmatpush1.msra.mxu0 0.0
        %1326 = vmatprep.subr.mxu0 0.0
        %1327 = vmatpush1.msra.mxu0 0.0
        %1328 = vmatprep.subr.mxu0 0.0
        %1329 = vmatpush1.msra.mxu0 0.0
        %1330 = vmatprep.subr.mxu0 0.0
        %1331 = vmatpush1.msra.mxu0 0.0
        %1332 = vmatprep.subr.mxu0 0.0
        %1333 = vmatpush1.msra.mxu0 0.0
        %1334 = vmatprep.subr.mxu0 0.0
        %1335 = vmatpush1.msra.mxu0 0.0
        %1336 = vmatprep.subr.mxu0 0.0
        %1337 = vmatpush1.msra.mxu0 0.0
        %1338 = vmatprep.subr.mxu0 0.0
        %1339 = vmatpush1.msra.mxu0 0.0
        %1340 = vmatprep.subr.mxu0 0.0
        %1341 = vmatpush1.msra.mxu0 0.0
        %1342 = vmatprep.subr.mxu0 0.0
        %1343 = vmatpush1.msra.mxu0 0.0
        %1344 = vmatprep.subr.mxu0 0.0
        %1345 = vmatpush1.msra.mxu0 0.0
        %1346 = vmatprep.subr.mxu0 0.0
        %1347 = vmatpush1.msra.mxu0 0.0
        %1348 = vmatprep.subr.mxu0 0.0
        %1349 = vmatpush1.msra.mxu0 0.0
        %1350 = vmatprep.subr.mxu0 0.0
        %1351 = vmatpush1.msra.mxu0 0.0
        %1352 = vmatprep.subr.mxu0 0.0
        %1353 = vmatpush1.msra.mxu0 0.0
        %1354 = vmatprep.mubr.f32.mxu0 0.0
        %1355 = vmatmul.mubr.f32.gmra.mrb[0].mxu0 %v1213
        %v1356 = vpop.f32.mrb[0].mxu0
        %v1357 = vadd.f32 0.0, %v1356
        %v1358 = vpop.f32.mrb[0].mxu0
        %v1359 = vadd.f32 0.0, %v1358
        %1360 = vdwg.mxu0
        %v1365 = vcombine.low %v1286, %v1288
        %v1366 = vcombine.low %v1357, %v1359
        %v1369 = vadd.f32 %v1217, %v1365
        %v1370 = vadd.f32 %v1218, %v1366
        %v1371 = vxor.u32 %v1369, 2147483648
        %v1372 = vmul.f32 %v1371, 1.442695
        %v1373 = vpow.pop %v1372
        %v1374 = vadd.f32 %v1373, 1.0
        %v1375 = vrcp.pop %v1374
        %v1376 = vmul.f32 1.0, %v1375
        %v1378 = vrot.slane %v1369, 4
        %v1380 = vxor.u32 %v1378, 2147483648
        %v1381 = vmul.f32 %v1380, 1.442695
        %v1382 = vpow.pop %v1381
        %v1383 = vadd.f32 %v1382, 1.0
        %v1384 = vrcp.pop %v1383
        %v1385 = vmul.f32 1.0, %v1384
        %v1386 = vtanh.pop %v1370
        %v1388 = vrot.slane %v1370, 4
        %v1390 = vxor.u32 %v1388, 2147483648
        %v1391 = vmul.f32 %v1390, 1.442695
        %v1392 = vpow.pop %v1391
        %v1393 = vadd.f32 %v1392, 1.0
        %v1394 = vrcp.pop %v1393
        %v1395 = vmul.f32 1.0, %v1394
        %v1396 = vmul.f32 %v1385, %v1211
        %v1397 = vmul.f32 %v1376, %v1386
        %v1398 = vadd.f32 %v1396, %v1397
        %v1399 = vtanh.pop %v1398
        %v1400 = vmul.f32 %v1395, %v1399
        %s1401 = scalar_lea.vmem %s341, 12 [#allocation11]
        %1402 = vst [vmem:[%s1401] sm:$0xf] %v1400
        %1403 = vst [vmem:[#allocation3] sm:$0xf] %v1400
        %1404 = vst [vmem:[#allocation4] sm:$0xf] %v1398
        %s1405 = sand.u32 %s189, 1
        %s1406 = scalar_lea.sflag [#allocation7], %s1405
        %s1407 = sand.u32 %s189, 1
        %s1408 = smul.addr %s1407, 16
        %s1409 = scalar_lea.vmem [#allocation11], %s1408
        // Predicated region
        $region61: #{tpu_custom_call.1} parent=43 // pred_check
          %p1410 = pneg %p199
        $region62: #{tpu_custom_call.1} parent=43 // pred_check_branch
          %1412 = sbr.rel (%p1410) target = $region64
        $region63: #{tpu_custom_call.1} parent=43 // pred_region
          %s1413 = smul.u32 4, %s29
          %s1415 = ssub.s32 256, 256
          %1416 = vsyncadd %s1406, %s1415
          %s1417 = sadd.s32 %s28, %s1413
          %s1418 = smul.addr %s1417, 64
          %s1419 = scalar_lea.hbm %s6, %s1418
          %s1420 = sshll.u32 %s1409, 4
          %s1421 = int_to_ptr.vmem [resolvable:$true] %s1420
          %1426 = dma.vmem_to_hbm [thread:$0]  %s1421, 256, %s1419, %s1406, 64, 64, 4
        $region64: #{tpu_custom_call.1} parent=43 // pred_fallthru
          _
      $region44: #{tpu_custom_call.1} parent=5 // pred_fallthru
        _
      %p1427 = scmp.le.s32.totalorder 2, %s19
      // Predicated region
      $region65: #{tpu_custom_call.1} parent=5 // pred_check
        %p1428 = pneg %p1427
      $region66: #{tpu_custom_call.1} parent=5 // pred_check_branch
        %1430 = sbr.rel (%p1428) target = $region68
      $region67: #{tpu_custom_call.1} parent=5 // pred_region
        %s1431 = ssub.s32 %s19, 2
        // Predicated region
        $region69: #{tpu_custom_call.1} parent=67 // pred_check
          %p1432 = pneg %p205
        $region70: #{tpu_custom_call.1} parent=67 // pred_check_branch
          %1434 = sbr.rel (%p1432) target = $region72
        $region71: #{tpu_custom_call.1} parent=67 // pred_region
          %s1435 = sand.u32 %s190, 1
          %s1436 = scalar_lea.sflag [#allocation7], %s1435
          %s1437 = sand.u32 %s190, 1
          %s1438 = smul.addr %s1437, 16
          %s1439 = scalar_lea.vmem [#allocation11], %s1438
          %1440 = dma.done %s1436, 256
        $region72: #{tpu_custom_call.1} parent=67 // pred_fallthru
          _
      $region68: #{tpu_custom_call.1} parent=5 // pred_fallthru
        _
    $region6: #{tpu_custom_call.1} parent=1 // loop_footer
      %s23 = sadd.s32 1, %s19
    $region7: #{tpu_custom_call.1} parent=1 // loop_footer_branch
      %18 = sbr.rel target = $region3
    $region8: #{tpu_custom_call.1} parent=1 // loop_exit
      _
    %1441 = vsyncpa [#allocation6], 1
    %s1442 = scalar_lea.sflag [#allocation6], 1
    %1443 = vsyncpa %s1442, 1
    %1444 = vsyncpa [#allocation9], 1
    %1445 = vsyncpa [#allocation7], 1
    %s1446 = scalar_lea.sflag [#allocation7], 1
    %1447 = vsyncpa %s1446, 1

</llo_original>
